<compile_context>
chip_gen: v5e
topology: v5e:2x2
jax: 0.10.0
libtpu: 0.0.40
codegen_flags: <defaults>
</compile_context>

<pallas_src>
import math

import numpy as np
import jax
import jax.numpy as jnp
from jax.experimental import pallas as pl
from jax.experimental.pallas import tpu as pltpu

# ----------------------------------------------------------------------------
# Model hyper-parameters (small, consistent with the module's constructor)
# ----------------------------------------------------------------------------
NUM_CLASSES = 8          # len(classes), index 0 = background
NUM_RELS = 8             # len(rel_classes)
EMBED_DIM = 32
HIDDEN_DIM = 32
OBJ_DIM = 64
SPATIAL_DIM = 32
FEATS_DIM = OBJ_DIM + SPATIAL_DIM + HIDDEN_DIM   # 128
BN_EPS = 1e-5
MXU_DTYPE = jnp.bfloat16                         # bf16 MXU operands, f32 epilogues

# fused "everything that reads box_pair_feats" RHS column layout (384 lanes)
_RC1_OFF = 0                                # relcnn_fc1            [0, 128)
_SUBMP_OFF = FEATS_DIM                      # sub_rel_mp_fc         [128, 192)
_OBJMP_OFF = FEATS_DIM + OBJ_DIM            # obj_rel_mp_fc         [192, 256)
_RELATT_OFF = FEATS_DIM + 2 * OBJ_DIM       # mp_atten_fc[0] (rel)  [256, 320)
_PNDIFF_OFF = FEATS_DIM + 3 * OBJ_DIM       # relpn logit diff      [320]
_FUSED_W = 384                              # padded to a 128 multiple
_DETROI_W = 128                             # roi-stub(64) | det-stub(8) | pad

# per-box table column layout (gathered to relation rows with one-hot matmuls)
_TAB_IM = 0        # image feature stub            [0, 3)
_TAB_BOX = 3       # boxes / 16                    [3, 7)
_TAB_CTR = 7       # center                        [7, 9)
_TAB_WH = 9        # width/height                  [9, 11)
_TAB_WORD = 11     # class word embedding          [11, 11 + EMBED_DIM)
_TAB_W = 11 + EMBED_DIM


# ----------------------------------------------------------------------------
# The single fused kernel
# ----------------------------------------------------------------------------
def _row_argmax_skip(logits, skip):
    """Lane argmax (and masked logits / max) skipping `skip` leading columns."""
    col = jax.lax.broadcasted_iota(jnp.int32, logits.shape, 1)
    valid = col >= skip
    masked = jnp.where(valid, logits, -1e30)
    m = jnp.max(masked, axis=-1, keepdims=True)
    idx = jnp.min(jnp.where(masked == m, col, logits.shape[-1]),
                  axis=-1, keepdims=True)
    return idx, masked, m, valid


def _fck_kernel(
    # data
    im_feat_ref, boxes_ref, im_col_ref, sub_col_ref, obj_col_ref,
    sub_row_ref, obj_row_ref,
    # fused / folded weights
    detroi_w_ref, detroi_t_ref,
    word_emb_ref,
    pair_w_ref, pair_t_ref, pair_relu_ref,
    fused_w_ref, fused_t_ref, fused_relu_ref,
    rc2_w_ref, rc2_t_ref,
    boxproj_w_ref, boxproj_t_ref,
    att2_row_ref,
    cls_w_ref, cls_t_ref,
    # outputs (lane-dense 128-wide slabs)
    box_out_ref, rel_out_ref,
):
    f32 = jnp.float32
    n_box = boxes_ref.shape[0]
    n_rel = sub_col_ref.shape[0]
    n_img = im_feat_ref.shape[0]

    def mm(a, b):     # MXU matmul: bf16 operands (cast in-kernel), f32 accumulate
        return jnp.dot(a.astype(MXU_DTYPE), b.astype(MXU_DTYPE),
                       preferred_element_type=f32)

    def mmf(a, b):    # exact f32 matmul for the one-hot selection gathers
        return jnp.dot(a, b, preferred_element_type=f32)

    # ---- detector / ROI stub (roi-stub + detector-stub as one padded matmul) ----
    im_sel = (jax.lax.broadcasted_iota(jnp.int32, (n_box, n_img), 1)
              == im_col_ref[...]).astype(f32)                              # [N,B]
    box_im_feat = mmf(im_sel, im_feat_ref[...])                            # [N,3]
    boxes = boxes_ref[...]
    boxes_s = boxes * (1.0 / 16.0)
    box_base = jnp.concatenate([box_im_feat, boxes_s], axis=-1)            # [N,7]
    det_head = mm(box_base, detroi_w_ref[...]) + detroi_t_ref[...]         # [N,128]
    box_feats = det_head[:, :OBJ_DIM]                                      # [N,64]
    obj_dists = det_head[:, OBJ_DIM:OBJ_DIM + NUM_CLASSES]                 # [N,C]

    # first-stage classes (argmax of non-bg logits == argmax of non-bg softmax)
    cls0_idx, _, _, _ = _row_argmax_skip(obj_dists, skip=1)                # [N,1]
    ccol = jax.lax.broadcasted_iota(jnp.int32, obj_dists.shape, 1)
    cls0_onehot = (ccol == cls0_idx).astype(f32)                           # [N,C]
    box_word = mmf(cls0_onehot, word_emb_ref[...])                         # [N,E]

    # ---- per-box table, gathered to relation rows with one-hot MXU matmuls ----
    wh = boxes[:, 2:4] - boxes[:, 0:2] + 1.0
    ctr = boxes[:, 0:2] + 0.5 * (wh - 1.0)
    box_tab = jnp.concatenate([box_base, ctr, wh, box_word], axis=-1)      # [N,_TAB_W]
    sel_sub = (jax.lax.broadcasted_iota(jnp.int32, (n_rel, n_box), 1)
               == sub_col_ref[...]).astype(f32)                            # [R,N]
    sel_obj = (jax.lax.broadcasted_iota(jnp.int32, (n_rel, n_box), 1)
               == obj_col_ref[...]).astype(f32)
    sub_tab = mmf(sel_sub, box_tab)                                        # [R,_TAB_W]
    obj_tab = mmf(sel_obj, box_tab)

    sub_ctr = sub_tab[:, _TAB_CTR:_TAB_WH]
    sub_wh = sub_tab[:, _TAB_WH:_TAB_WORD]
    obj_ctr = obj_tab[:, _TAB_CTR:_TAB_WH]
    obj_wh = obj_tab[:, _TAB_WH:_TAB_WORD]
    d_ctr = (obj_ctr - sub_ctr) / sub_wh
    d_size = jnp.log(obj_wh / sub_wh)

    # pair features: [union-stub(11) | spatial(4) | word(2E)] -> one [79,128] matmul
    pair_in = jnp.concatenate(
        [sub_tab[:, _TAB_IM:_TAB_CTR],        # sub image feat + sub boxes/16  (7)
         obj_tab[:, _TAB_BOX:_TAB_CTR],       # obj boxes/16                   (4)
         d_ctr, d_size,                       # spatial                        (4)
         sub_tab[:, _TAB_WORD:],              # sub word                       (E)
         obj_tab[:, _TAB_WORD:]], axis=-1)    # obj word                       (E)
    pre = mm(pair_in, pair_w_ref[...]) + pair_t_ref[...]
    box_pair_feats = jnp.where(pair_relu_ref[...] > 0.0,
                               jnp.maximum(pre, 0.0), pre)                 # [R,128]

    # ---- ONE fused matmul for everything that consumes box_pair_feats ---------
    fused = mm(box_pair_feats, fused_w_ref[...]) + fused_t_ref[...]        # [R,384]
    fused = jnp.where(fused_relu_ref[...] > 0.0, jnp.maximum(fused, 0.0), fused)
    pair_fc1 = fused[:, _RC1_OFF:_RC1_OFF + FEATS_DIM]
    sub_mp = fused[:, _SUBMP_OFF:_SUBMP_OFF + OBJ_DIM]
    obj_mp = fused[:, _OBJMP_OFF:_OBJMP_OFF + OBJ_DIM]
    rel_att = fused[:, _RELATT_OFF:_RELATT_OFF + OBJ_DIM]
    pn_diff = fused[:, _PNDIFF_OFF:_PNDIFF_OFF + 1]                        # [R,1]
    # softmax(p)[1] > softmax(p)[0]  <=>  logit diff > 0  (relpn softmax removed)
    pos_col = (pn_diff > 0.0).astype(f32)                                  # [R,1]

    # relation class distribution (graph-constrained -> fused row softmax)
    rel_logits = mm(pair_fc1, rc2_w_ref[...]) + rc2_t_ref[...]             # [R,NUM_RELS]
    z = rel_logits - jnp.max(rel_logits, axis=-1, keepdims=True)
    e = jnp.exp(z)
    pred_scores = e * pl.reciprocal(jnp.sum(e, axis=-1, keepdims=True), approx=True)

    # ---- message passing over positive pairs (lane-major, MXU aggregation) ----
    box_proj = mm(box_feats, boxproj_w_ref[...]) + boxproj_t_ref[...]      # [N,128]
    box_mp = box_proj[:, :OBJ_DIM]
    box_att = box_proj[:, OBJ_DIM:]

    # positive flag, lane-major [1,R] (column->row via iota identity, no transpose op)
    eye = (jax.lax.broadcasted_iota(jnp.int32, (n_rel, n_rel), 0)
           == jax.lax.broadcasted_iota(jnp.int32, (n_rel, n_rel), 1)).astype(f32)
    pos_row = jnp.sum(eye * pos_col, axis=0, keepdims=True)                # [1,R]

    sel_sub_nr = (jax.lax.broadcasted_iota(jnp.int32, (n_box, n_rel), 0)
                  == sub_row_ref[...]).astype(f32)                         # [N,R]
    sel_obj_nr = (jax.lax.broadcasted_iota(jnp.int32, (n_box, n_rel), 0)
                  == obj_row_ref[...]).astype(f32)
    sub_mask = sel_sub_nr * pos_row
    obj_mask = sel_obj_nr * pos_row

    # att[n,r] = relu(box_att[n] + rel_att[r]) . att2_w   (att2 bias cancels in softmax)
    h = jnp.maximum(box_att[:, None, :] + rel_att[None, :, :], 0.0)        # [N,R,64]
    att = jnp.sum(h * att2_row_ref[...][None, :, :], axis=-1)              # [N,R]

    def masked_softmax(logits, mask):
        neg = jnp.where(mask > 0.0, logits, -1e30)
        m = jnp.max(neg, axis=-1, keepdims=True)
        ex = jnp.exp(neg - m) * mask
        s = jnp.sum(ex, axis=-1, keepdims=True)
        return ex * pl.reciprocal(jnp.maximum(s, 1e-20), approx=True)

    a_sub = masked_softmax(att, sub_mask)                                  # [N,R]
    a_obj = masked_softmax(att, obj_mask)
    agg = mm(a_sub, sub_mp) + mm(a_obj, obj_mp)                            # [N,64]
    new_feats = jnp.maximum(box_mp + agg, 0.0)
    # TODO(synk): original updates boxes sequentially in decreasing out-degree
    # order; here all boxes update in parallel from pre-update features
    # (mp_iter_num = 1 in the constructor).
    has_sub = jnp.sum(sub_mask, axis=-1, keepdims=True) > 0.0              # [N,1]
    box_feats2 = jnp.where(has_sub, new_feats, box_feats)

    # ---- final object classification (softmax over non-bg classes fused) ------
    cls_logits = mm(box_feats2, cls_w_ref[...]) + cls_t_ref[...]           # [N,C]
    cls_idx, masked, m, valid = _row_argmax_skip(cls_logits, skip=1)
    e2 = jnp.where(valid, jnp.exp(masked - m), 0.0)
    prob = e2 * pl.reciprocal(jnp.sum(e2, axis=-1, keepdims=True), approx=True)
    obj_scores = jnp.max(prob, axis=-1, keepdims=True)                     # [N,1]

    # ---- outputs: two lane-dense 128-wide slabs -------------------------------
    box_out_ref[...] = jnp.zeros_like(box_out_ref)
    box_out_ref[:, 0:1] = obj_scores
    box_out_ref[:, 1:2] = cls_idx.astype(f32)

    rel_out_ref[...] = jnp.zeros_like(rel_out_ref)
    rel_out_ref[:, 0:NUM_RELS] = pred_scores
    rel_out_ref[:, NUM_RELS:NUM_RELS + 1] = pos_col


# ----------------------------------------------------------------------------
# Parameter initialization (deterministic, PyTorch-default-like)
# ----------------------------------------------------------------------------
def _linear_params(key, k_in, k_out, w_scale=None, bias_init=None):
    if w_scale is None:
        w_scale = 1.0 / math.sqrt(k_in)
    kw, kb = jax.random.split(key)
    w = jax.random.uniform(kw, (k_in, k_out), jnp.float32, -w_scale, w_scale)
    if bias_init is None:
        b = jax.random.uniform(kb, (k_out,), jnp.float32, -w_scale, w_scale)
    else:
        b = jnp.asarray(bias_init, jnp.float32)
    return w, b


def _bn_fold(key, n):
    k1, k2, k3 = jax.random.split(key, 3)
    gamma = 1.0 + 0.1 * jax.random.normal(k1, (n,), jnp.float32)
    beta = 0.1 * jax.random.normal(k2, (n,), jnp.float32)
    running_mean = 0.1 * jax.random.normal(k3, (n,), jnp.float32)
    running_var = jnp.ones((n,), jnp.float32)
    scale = gamma / jnp.sqrt(running_var + BN_EPS)
    shift = beta - running_mean * scale
    return scale, shift


def init_params(key):
    keys = jax.random.split(key, 20)
    p = {}
    # Frozen word embedding  (classes_word_embedding)
    p['word_emb'] = 0.1 * jax.random.normal(keys[0], (NUM_CLASSES, EMBED_DIM), jnp.float32)
    # spatial_fc: Linear(4, SPATIAL_DIM) + BN + ReLU
    p['sp_w'], p['sp_b'] = _linear_params(keys[1], 4, SPATIAL_DIM)
    p['sp_s'], p['sp_t'] = _bn_fold(keys[2], SPATIAL_DIM)
    # word_fc: Linear(2*EMBED_DIM, HIDDEN_DIM) + BN + ReLU
    p['wd_w'], p['wd_b'] = _linear_params(keys[3], 2 * EMBED_DIM, HIDDEN_DIM)
    p['wd_s'], p['wd_t'] = _bn_fold(keys[4], HIDDEN_DIM)
    # relpn_fc: Linear(FEATS_DIM, 2)  (bias chosen so positives exist)
    p['relpn_w'], p['relpn_b'] = _linear_params(
        keys[5], FEATS_DIM, 2, w_scale=0.01, bias_init=[-2.0, 2.0])
    # relcnn_fc1: Linear(FEATS_DIM, FEATS_DIM) + ReLU
    p['rc1_w'], p['rc1_b'] = _linear_params(keys[6], FEATS_DIM, FEATS_DIM)
    # relcnn_fc2: Linear(FEATS_DIM, NUM_RELS)   (graph_constrain=True)
    p['rc2_w'], p['rc2_b'] = _linear_params(keys[7], FEATS_DIM, NUM_RELS)
    # message passing FCs
    p['box_mp_w'], p['box_mp_b'] = _linear_params(keys[8], OBJ_DIM, OBJ_DIM)
    p['sub_mp_w'], p['sub_mp_b'] = _linear_params(keys[9], FEATS_DIM, OBJ_DIM)
    p['obj_mp_w'], p['obj_mp_b'] = _linear_params(keys[10], FEATS_DIM, OBJ_DIM)
    p['att1_w'], p['att1_b'] = _linear_params(keys[11], FEATS_DIM + OBJ_DIM, OBJ_DIM)
    p['att2_w'], p['att2_b'] = _linear_params(keys[12], OBJ_DIM, 1)
    # cls_fc: Linear(OBJ_DIM, NUM_CLASSES)
    p['cls_w'], p['cls_b'] = _linear_params(keys[13], OBJ_DIM, NUM_CLASSES)
    # ---- deterministic stubs for the detection backbone ----------------------
    # TODO(synk): ObjectDetector / RoIAlign / UnionBoxesAndFeats / VGG roi_fmap
    # are full CNN sub-networks; replaced by small linear projections below.
    p['roi_w'], p['roi_b'] = _linear_params(keys[14], 7, OBJ_DIM)      # box ROI feats stub
    p['uni_w'], p['uni_b'] = _linear_params(keys[15], 11, OBJ_DIM)     # union-box feats stub
    p['det_w'], p['det_b'] = _linear_params(keys[16], 7, NUM_CLASSES)  # detector dists stub
    return p


def prepare_params(p):
    """Fold BN/biases, merge shared-LHS heads into lane-dense padded RHS, pre-cast bf16."""
    as_w = lambda w: w.astype(MXU_DTYPE)
    f = {'word_emb': p['word_emb']}
    # roi-stub + detector-stub fused, padded to 128 output lanes
    dw = jnp.zeros((7, _DETROI_W), jnp.float32)
    dw = dw.at[:, :OBJ_DIM].set(p['roi_w'])
    dw = dw.at[:, OBJ_DIM:OBJ_DIM + NUM_CLASSES].set(p['det_w'])
    dt = jnp.zeros((1, _DETROI_W), jnp.float32)
    dt = dt.at[0, :OBJ_DIM].set(p['roi_b'])
    dt = dt.at[0, OBJ_DIM:OBJ_DIM + NUM_CLASSES].set(p['det_b'])
    f['detroi_w'], f['detroi_t'] = as_w(dw), dt
    # pair-feature head: union-stub | spatial(BN folded) | word(BN folded), block-diagonal
    sp_w = p['sp_w'] * p['sp_s'][None, :]
    sp_t = p['sp_b'] * p['sp_s'] + p['sp_t']
    wd_w = p['wd_w'] * p['wd_s'][None, :]
    wd_t = p['wd_b'] * p['wd_s'] + p['wd_t']
    kin = 11 + 4 + 2 * EMBED_DIM
    pw = jnp.zeros((kin, FEATS_DIM), jnp.float32)
    pw = pw.at[0:11, 0:OBJ_DIM].set(p['uni_w'])
    pw = pw.at[11:15, OBJ_DIM:OBJ_DIM + SPATIAL_DIM].set(sp_w)
    pw = pw.at[15:, OBJ_DIM + SPATIAL_DIM:].set(wd_w)
    f['pair_w'] = as_w(pw)
    f['pair_t'] = jnp.concatenate([p['uni_b'], sp_t, wd_t]).reshape(1, FEATS_DIM)
    f['pair_relu'] = jnp.concatenate(
        [jnp.zeros((OBJ_DIM,), jnp.float32),
         jnp.ones((SPATIAL_DIM + HIDDEN_DIM,), jnp.float32)]).reshape(1, FEATS_DIM)
    # ONE fused RHS for everything that reads box_pair_feats:
    #   [relcnn_fc1 | sub_mp | obj_mp | att1(rel) | relpn diff | pad] -> 384 lanes
    fw = jnp.zeros((FEATS_DIM, _FUSED_W), jnp.float32)
    fw = fw.at[:, _RC1_OFF:_RC1_OFF + FEATS_DIM].set(p['rc1_w'])
    fw = fw.at[:, _SUBMP_OFF:_SUBMP_OFF + OBJ_DIM].set(p['sub_mp_w'])
    fw = fw.at[:, _OBJMP_OFF:_OBJMP_OFF + OBJ_DIM].set(p['obj_mp_w'])
    fw = fw.at[:, _RELATT_OFF:_RELATT_OFF + OBJ_DIM].set(p['att1_w'][OBJ_DIM:])
    fw = fw.at[:, _PNDIFF_OFF].set(p['relpn_w'][:, 1] - p['relpn_w'][:, 0])
    ft = jnp.zeros((1, _FUSED_W), jnp.float32)
    ft = ft.at[0, _RC1_OFF:_RC1_OFF + FEATS_DIM].set(p['rc1_b'])
    ft = ft.at[0, _SUBMP_OFF:_SUBMP_OFF + OBJ_DIM].set(p['sub_mp_b'])
    ft = ft.at[0, _OBJMP_OFF:_OBJMP_OFF + OBJ_DIM].set(p['obj_mp_b'])
    ft = ft.at[0, _PNDIFF_OFF].set(p['relpn_b'][1] - p['relpn_b'][0])
    fr = jnp.zeros((1, _FUSED_W), jnp.float32)
    fr = fr.at[0, _RC1_OFF:_RC1_OFF + FEATS_DIM].set(1.0)   # ReLU only on the fc1 block
    f['fused_w'], f['fused_t'], f['fused_relu'] = as_w(fw), ft, fr
    # relcnn_fc2 and cls_fc heads (softmax epilogues fused in-kernel)
    f['rc2_w'], f['rc2_t'] = as_w(p['rc2_w']), p['rc2_b'].reshape(1, NUM_RELS)
    f['cls_w'], f['cls_t'] = as_w(p['cls_w']), p['cls_b'].reshape(1, NUM_CLASSES)
    # message passing: box-side projections fused (box_mp_fc | att1 box part)
    f['boxproj_w'] = as_w(jnp.concatenate([p['box_mp_w'], p['att1_w'][:OBJ_DIM]], axis=1))
    f['boxproj_t'] = jnp.concatenate([p['box_mp_b'], p['att1_b']]).reshape(1, 2 * OBJ_DIM)
    # second attention FC as a lane row (its scalar bias cancels in the softmax)
    f['att2_row'] = p['att2_w'].reshape(1, OBJ_DIM)
    return f


# ----------------------------------------------------------------------------
# Host-side candidate pair enumeration (eval path input prep)
# ----------------------------------------------------------------------------
def get_rel_inds(im_inds):
    """All same-image ordered pairs excluding the diagonal (host prep, as in eval)."""
    im = np.asarray(im_inds)
    rels = [(int(im[i]), i, j)
            for i in range(im.shape[0]) for j in range(im.shape[0])
            if i != j and im[i] == im[j]]
    if not rels:
        rels = [(int(im[0]), 0, 0)]
    return np.asarray(rels, dtype=np.int32)


# ----------------------------------------------------------------------------
# Forward pass (eval / inference semantics, mp_iter_num = 1)
# ----------------------------------------------------------------------------
@jax.jit
def forward_core(fp, x, boxes, im_inds, sub_idx, obj_idx):
    n_box = boxes.shape[0]
    n_rel = sub_idx.shape[0]

    # TODO(synk): ObjectDetector backbone / result.fmap replaced by a per-image
    # mean + linear stubs applied inside the fused kernel.
    im_feat = jnp.mean(x, axis=(2, 3))                                 # [B, 3]
    im_col = im_inds.reshape(n_box, 1).astype(jnp.int32)
    sub_col = sub_idx.reshape(n_rel, 1).astype(jnp.int32)
    obj_col = obj_idx.reshape(n_rel, 1).astype(jnp.int32)
    sub_row = sub_idx.reshape(1, n_rel).astype(jnp.int32)
    obj_row = obj_idx.reshape(1, n_rel).astype(jnp.int32)

    vmem = pl.BlockSpec(memory_space=pltpu.MemorySpace.VMEM)
    box_out, rel_out = pl.pallas_call(
        _fck_kernel,
        out_shape=(jax.ShapeDtypeStruct((n_box, 128), jnp.float32),
                   jax.ShapeDtypeStruct((n_rel, 128), jnp.float32)),
        in_specs=[vmem] * 23,
        out_specs=(vmem, vmem),
    )(im_feat, boxes, im_col, sub_col, obj_col, sub_row, obj_row,
      fp['detroi_w'], fp['detroi_t'], fp['word_emb'],
      fp['pair_w'], fp['pair_t'], fp['pair_relu'],
      fp['fused_w'], fp['fused_t'], fp['fused_relu'],
      fp['rc2_w'], fp['rc2_t'],
      fp['boxproj_w'], fp['boxproj_t'], fp['att2_row'],
      fp['cls_w'], fp['cls_t'])

    obj_scores = box_out[:, 0]
    box_classes = box_out[:, 1].astype(jnp.int32)
    pred_scores_all = rel_out[:, :NUM_RELS]
    pos_mask = rel_out[:, NUM_RELS] > 0.5
    return obj_scores, box_classes, pos_mask, pred_scores_all


def fck_forward(fparams, x, boxes, im_inds):
    # Candidate-pair enumeration is input preparation (host), as in the eval path.
    rel_inds = get_rel_inds(im_inds)                                # [R, 3] (im, sub, obj)
    sub_idx = jnp.asarray(rel_inds[:, 1], jnp.int32)
    obj_idx = jnp.asarray(rel_inds[:, 2], jnp.int32)

    obj_scores, box_classes, pos_mask, pred_scores_all = forward_core(
        fparams, x, boxes, im_inds, sub_idx, obj_idx)

    # The ONLY device->host sync: final positive-pair selection (as in the
    # original's `box_pos_pair_ind` filter). It serializes the pipeline once.
    pos = np.nonzero(np.asarray(jax.device_get(pos_mask)))[0]
    if pos.size == 0:
        return None                                                 # matches original
    rel_pairs = jnp.asarray(rel_inds[pos, 1:], jnp.int32)
    pred_scores = pred_scores_all[jnp.asarray(pos, jnp.int32)]
    # filter_dets-style output
    return boxes, obj_scores, box_classes, rel_pairs, pred_scores


# ----------------------------------------------------------------------------
if __name__ == "__main__":
    key = jax.random.PRNGKey(0)
    k_x, k_p = jax.random.split(key)

    # layout: NCHW images (same as PyTorch input convention)
    B, C, H, W = 2, 3, 16, 16
    x = jax.random.normal(k_x, (B, C, H, W), jnp.float32)

    # deterministic boxes: 4 per image, global indexing across the batch
    boxes_per_im = jnp.array([[0., 0., 7., 7.],
                              [4., 4., 12., 12.],
                              [8., 2., 15., 10.],
                              [2., 8., 10., 15.]], jnp.float32)
    boxes = jnp.concatenate([boxes_per_im, boxes_per_im + 0.5], axis=0)   # [8, 4]
    im_inds = jnp.array([0, 0, 0, 0, 1, 1, 1, 1], jnp.int32)

    params = init_params(k_p)
    fparams = prepare_params(params)

    out = fck_forward(fparams, x, boxes, im_inds)
    assert out is not None, "empty relation proposal set"
    boxes_o, obj_scores, box_classes, rel_pairs, pred_scores = out
    jax.block_until_ready(pred_scores)
    jax.block_until_ready(obj_scores)

    assert pred_scores.shape[1] == NUM_RELS
    assert obj_scores.shape[0] == boxes.shape[0]
    assert bool(jnp.all(jnp.isfinite(pred_scores)))
    assert bool(jnp.all(jnp.isfinite(obj_scores)))
    # row-softmax (approx reciprocal) should still normalize to ~1
    assert bool(jnp.all(jnp.abs(jnp.sum(pred_scores, axis=1) - 1.0) < 1e-2))
    assert bool(jnp.all((box_classes >= 1) & (box_classes < NUM_CLASSES)))
    print("KERNEL_OK")
</pallas_src>

<mosaic_0001>
module attributes {stable_mosaic.version = 11 : i64} {
  func.func @_fck_kernel(%arg0: memref<2x3xf32, #tpu.memory_space<vmem>>, %arg1: memref<8x4xf32, #tpu.memory_space<vmem>>, %arg2: memref<8x1xi32, #tpu.memory_space<vmem>>, %arg3: memref<24x1xi32, #tpu.memory_space<vmem>>, %arg4: memref<24x1xi32, #tpu.memory_space<vmem>>, %arg5: memref<1x24xi32, #tpu.memory_space<vmem>>, %arg6: memref<1x24xi32, #tpu.memory_space<vmem>>, %arg7: memref<7x128xbf16, #tpu.memory_space<vmem>>, %arg8: memref<1x128xf32, #tpu.memory_space<vmem>>, %arg9: memref<8x32xf32, #tpu.memory_space<vmem>>, %arg10: memref<79x128xbf16, #tpu.memory_space<vmem>>, %arg11: memref<1x128xf32, #tpu.memory_space<vmem>>, %arg12: memref<1x128xf32, #tpu.memory_space<vmem>>, %arg13: memref<128x384xbf16, #tpu.memory_space<vmem>>, %arg14: memref<1x384xf32, #tpu.memory_space<vmem>>, %arg15: memref<1x384xf32, #tpu.memory_space<vmem>>, %arg16: memref<128x8xbf16, #tpu.memory_space<vmem>>, %arg17: memref<1x8xf32, #tpu.memory_space<vmem>>, %arg18: memref<64x128xbf16, #tpu.memory_space<vmem>>, %arg19: memref<1x128xf32, #tpu.memory_space<vmem>>, %arg20: memref<1x64xf32, #tpu.memory_space<vmem>>, %arg21: memref<64x8xbf16, #tpu.memory_space<vmem>>, %arg22: memref<1x8xf32, #tpu.memory_space<vmem>>, %arg23: memref<8x128xf32, #tpu.memory_space<vmem>>, %arg24: memref<24x128xf32, #tpu.memory_space<vmem>>) attributes {dimension_semantics = [], scalar_prefetch = 0 : i64, scratch_operands = 0 : i64, tpu.core_type = #tpu.core_type<tc>} {
    %0 = tpu.iota {dimensions = array<i32: 1>} : vector<8x2xi32>
    %c0 = arith.constant 0 : index
    %c0_0 = arith.constant 0 : index
    %1 = vector.load %arg2[%c0, %c0_0] : memref<8x1xi32, #tpu.memory_space<vmem>>, vector<8x1xi32>
    %2 = vector.broadcast %1 : vector<8x1xi32> to vector<8x2xi32>
    %3 = arith.cmpi eq, %0, %2 : vector<8x2xi32>
    %4 = arith.extui %3 : vector<8x2xi1> to vector<8x2xi32>
    %5 = arith.sitofp %4 : vector<8x2xi32> to vector<8x2xf32>
    %c0_1 = arith.constant 0 : index
    %c0_2 = arith.constant 0 : index
    %6 = vector.load %arg0[%c0_1, %c0_2] : memref<2x3xf32, #tpu.memory_space<vmem>>, vector<2x3xf32>
    %cst = arith.constant dense<0.000000e+00> : vector<8x3xf32>
    %7 = tpu.matmul %5, %6, %cst {dimension_numbers = #tpu.dot_dimension_numbers<[1], [0], [0], [1], [0, 0, 1, 1], [], []>} : vector<8x2xf32>, vector<2x3xf32>, vector<8x3xf32> -> vector<8x3xf32>
    %c0_3 = arith.constant 0 : index
    %c0_4 = arith.constant 0 : index
    %8 = vector.load %arg1[%c0_3, %c0_4] : memref<8x4xf32, #tpu.memory_space<vmem>>, vector<8x4xf32>
    %cst_5 = arith.constant 6.250000e-02 : f32
    %9 = vector.broadcast %cst_5 : f32 to vector<8x4xf32>
    %10 = arith.mulf %8, %9 : vector<8x4xf32>
    %11 = tpu.concatenate %7, %10 in 1 : vector<8x3xf32>, vector<8x4xf32> -> vector<8x7xf32>
    %c0_6 = arith.constant 0 : index
    %c0_7 = arith.constant 0 : index
    %12 = vector.load %arg7[%c0_6, %c0_7] : memref<7x128xbf16, #tpu.memory_space<vmem>>, vector<7x128xbf16>
    %13 = arith.truncf %11 : vector<8x7xf32> to vector<8x7xbf16>
    %cst_8 = arith.constant dense<0.000000e+00> : vector<8x128xf32>
    %14 = tpu.matmul %13, %12, %cst_8 {dimension_numbers = #tpu.dot_dimension_numbers<[1], [0], [0], [1], [0, 0, 1, 1], [], []>} : vector<8x7xbf16>, vector<7x128xbf16>, vector<8x128xf32> -> vector<8x128xf32>
    %c0_9 = arith.constant 0 : index
    %c0_10 = arith.constant 0 : index
    %15 = vector.load %arg8[%c0_9, %c0_10] : memref<1x128xf32, #tpu.memory_space<vmem>>, vector<1x128xf32>
    %16 = vector.broadcast %15 : vector<1x128xf32> to vector<8x128xf32>
    %17 = arith.addf %14, %16 : vector<8x128xf32>
    %18 = vector.extract_strided_slice %17 {offsets = [0, 0], sizes = [8, 64], strides = [1, 1]} : vector<8x128xf32> to vector<8x64xf32>
    %19 = vector.extract_strided_slice %17 {offsets = [0, 64], sizes = [8, 8], strides = [1, 1]} : vector<8x128xf32> to vector<8x8xf32>
    %20 = tpu.iota {dimensions = array<i32: 1>} : vector<8x8xi32>
    %c1_i32 = arith.constant 1 : i32
    %21 = vector.broadcast %c1_i32 : i32 to vector<8x8xi32>
    %22 = arith.cmpi sge, %20, %21 : vector<8x8xi32>
    %cst_11 = arith.constant -1.000000e+30 : f32
    %23 = vector.broadcast %cst_11 : f32 to vector<8x8xf32>
    %24 = arith.select %22, %19, %23 : vector<8x8xi1>, vector<8x8xf32>
    %cst_12 = arith.constant dense<0xFF800000> : vector<8xf32>
    %25 = vector.multi_reduction <maximumf>, %24, %cst_12 [1] : vector<8x8xf32> to vector<8xf32>
    %26 = vector.shape_cast %25 : vector<8xf32> to vector<8x1xf32>
    %27 = vector.broadcast %26 : vector<8x1xf32> to vector<8x8xf32>
    %28 = arith.cmpf oeq, %24, %27 : vector<8x8xf32>
    %c8_i32 = arith.constant 8 : i32
    %29 = vector.broadcast %c8_i32 : i32 to vector<8x8xi32>
    %30 = arith.select %28, %20, %29 : vector<8x8xi1>, vector<8x8xi32>
    %cst_13 = arith.constant dense<2147483647> : vector<8xi32>
    %31 = vector.multi_reduction <minsi>, %30, %cst_13 [1] : vector<8x8xi32> to vector<8xi32>
    %32 = vector.shape_cast %31 : vector<8xi32> to vector<8x1xi32>
    %33 = tpu.iota {dimensions = array<i32: 1>} : vector<8x8xi32>
    %34 = vector.broadcast %32 : vector<8x1xi32> to vector<8x8xi32>
    %35 = arith.cmpi eq, %33, %34 : vector<8x8xi32>
    %36 = arith.extui %35 : vector<8x8xi1> to vector<8x8xi32>
    %37 = arith.sitofp %36 : vector<8x8xi32> to vector<8x8xf32>
    %c0_14 = arith.constant 0 : index
    %c0_15 = arith.constant 0 : index
    %38 = vector.load %arg9[%c0_14, %c0_15] : memref<8x32xf32, #tpu.memory_space<vmem>>, vector<8x32xf32>
    %cst_16 = arith.constant dense<0.000000e+00> : vector<8x32xf32>
    %39 = tpu.matmul %37, %38, %cst_16 {dimension_numbers = #tpu.dot_dimension_numbers<[1], [0], [0], [1], [0, 0, 1, 1], [], []>} : vector<8x8xf32>, vector<8x32xf32>, vector<8x32xf32> -> vector<8x32xf32>
    %40 = vector.extract_strided_slice %8 {offsets = [0, 2], sizes = [8, 2], strides = [1, 1]} : vector<8x4xf32> to vector<8x2xf32>
    %41 = vector.extract_strided_slice %8 {offsets = [0, 0], sizes = [8, 2], strides = [1, 1]} : vector<8x4xf32> to vector<8x2xf32>
    %42 = arith.subf %40, %41 : vector<8x2xf32>
    %cst_17 = arith.constant 1.000000e+00 : f32
    %43 = vector.broadcast %cst_17 : f32 to vector<8x2xf32>
    %44 = arith.addf %42, %43 : vector<8x2xf32>
    %45 = vector.extract_strided_slice %8 {offsets = [0, 0], sizes = [8, 2], strides = [1, 1]} : vector<8x4xf32> to vector<8x2xf32>
    %cst_18 = arith.constant 1.000000e+00 : f32
    %46 = vector.broadcast %cst_18 : f32 to vector<8x2xf32>
    %47 = arith.subf %44, %46 : vector<8x2xf32>
    %cst_19 = arith.constant 5.000000e-01 : f32
    %48 = vector.broadcast %cst_19 : f32 to vector<8x2xf32>
    %49 = arith.mulf %48, %47 : vector<8x2xf32>
    %50 = arith.addf %45, %49 : vector<8x2xf32>
    %51 = tpu.concatenate %11, %50, %44, %39 in 1 : vector<8x7xf32>, vector<8x2xf32>, vector<8x2xf32>, vector<8x32xf32> -> vector<8x43xf32>
    %52 = tpu.iota {dimensions = array<i32: 1>} : vector<24x8xi32>
    %c0_20 = arith.constant 0 : index
    %c0_21 = arith.constant 0 : index
    %53 = vector.load %arg3[%c0_20, %c0_21] : memref<24x1xi32, #tpu.memory_space<vmem>>, vector<24x1xi32>
    %54 = vector.broadcast %53 : vector<24x1xi32> to vector<24x8xi32>
    %55 = arith.cmpi eq, %52, %54 : vector<24x8xi32>
    %56 = arith.extui %55 : vector<24x8xi1> to vector<24x8xi32>
    %57 = arith.sitofp %56 : vector<24x8xi32> to vector<24x8xf32>
    %58 = tpu.iota {dimensions = array<i32: 1>} : vector<24x8xi32>
    %c0_22 = arith.constant 0 : index
    %c0_23 = arith.constant 0 : index
    %59 = vector.load %arg4[%c0_22, %c0_23] : memref<24x1xi32, #tpu.memory_space<vmem>>, vector<24x1xi32>
    %60 = vector.broadcast %59 : vector<24x1xi32> to vector<24x8xi32>
    %61 = arith.cmpi eq, %58, %60 : vector<24x8xi32>
    %62 = arith.extui %61 : vector<24x8xi1> to vector<24x8xi32>
    %63 = arith.sitofp %62 : vector<24x8xi32> to vector<24x8xf32>
    %cst_24 = arith.constant dense<0.000000e+00> : vector<24x43xf32>
    %64 = tpu.matmul %57, %51, %cst_24 {dimension_numbers = #tpu.dot_dimension_numbers<[1], [0], [0], [1], [0, 0, 1, 1], [], []>} : vector<24x8xf32>, vector<8x43xf32>, vector<24x43xf32> -> vector<24x43xf32>
    %cst_25 = arith.constant dense<0.000000e+00> : vector<24x43xf32>
    %65 = tpu.matmul %63, %51, %cst_25 {dimension_numbers = #tpu.dot_dimension_numbers<[1], [0], [0], [1], [0, 0, 1, 1], [], []>} : vector<24x8xf32>, vector<8x43xf32>, vector<24x43xf32> -> vector<24x43xf32>
    %66 = vector.extract_strided_slice %64 {offsets = [0, 7], sizes = [24, 2], strides = [1, 1]} : vector<24x43xf32> to vector<24x2xf32>
    %67 = vector.extract_strided_slice %64 {offsets = [0, 9], sizes = [24, 2], strides = [1, 1]} : vector<24x43xf32> to vector<24x2xf32>
    %68 = vector.extract_strided_slice %65 {offsets = [0, 7], sizes = [24, 2], strides = [1, 1]} : vector<24x43xf32> to vector<24x2xf32>
    %69 = vector.extract_strided_slice %65 {offsets = [0, 9], sizes = [24, 2], strides = [1, 1]} : vector<24x43xf32> to vector<24x2xf32>
    %70 = arith.subf %68, %66 : vector<24x2xf32>
    %71 = arith.divf %70, %67 : vector<24x2xf32>
    %72 = arith.divf %69, %67 : vector<24x2xf32>
    %73 = math.log %72 : vector<24x2xf32>
    %74 = vector.extract_strided_slice %64 {offsets = [0, 0], sizes = [24, 7], strides = [1, 1]} : vector<24x43xf32> to vector<24x7xf32>
    %75 = vector.extract_strided_slice %65 {offsets = [0, 3], sizes = [24, 4], strides = [1, 1]} : vector<24x43xf32> to vector<24x4xf32>
    %76 = vector.extract_strided_slice %64 {offsets = [0, 11], sizes = [24, 32], strides = [1, 1]} : vector<24x43xf32> to vector<24x32xf32>
    %77 = vector.extract_strided_slice %65 {offsets = [0, 11], sizes = [24, 32], strides = [1, 1]} : vector<24x43xf32> to vector<24x32xf32>
    %78 = tpu.concatenate %74, %75, %71, %73, %76, %77 in 1 : vector<24x7xf32>, vector<24x4xf32>, vector<24x2xf32>, vector<24x2xf32>, vector<24x32xf32>, vector<24x32xf32> -> vector<24x79xf32>
    %c0_26 = arith.constant 0 : index
    %c0_27 = arith.constant 0 : index
    %79 = vector.load %arg10[%c0_26, %c0_27] : memref<79x128xbf16, #tpu.memory_space<vmem>>, vector<79x128xbf16>
    %80 = arith.truncf %78 : vector<24x79xf32> to vector<24x79xbf16>
    %cst_28 = arith.constant dense<0.000000e+00> : vector<24x128xf32>
    %81 = tpu.matmul %80, %79, %cst_28 {dimension_numbers = #tpu.dot_dimension_numbers<[1], [0], [0], [1], [0, 0, 1, 1], [], []>} : vector<24x79xbf16>, vector<79x128xbf16>, vector<24x128xf32> -> vector<24x128xf32>
    %c0_29 = arith.constant 0 : index
    %c0_30 = arith.constant 0 : index
    %82 = vector.load %arg11[%c0_29, %c0_30] : memref<1x128xf32, #tpu.memory_space<vmem>>, vector<1x128xf32>
    %83 = vector.broadcast %82 : vector<1x128xf32> to vector<24x128xf32>
    %84 = arith.addf %81, %83 : vector<24x128xf32>
    %c0_31 = arith.constant 0 : index
    %c0_32 = arith.constant 0 : index
    %85 = vector.load %arg12[%c0_31, %c0_32] : memref<1x128xf32, #tpu.memory_space<vmem>>, vector<1x128xf32>
    %cst_33 = arith.constant 0.000000e+00 : f32
    %86 = vector.broadcast %cst_33 : f32 to vector<1x128xf32>
    %87 = arith.cmpf ogt, %85, %86 : vector<1x128xf32>
    %cst_34 = arith.constant 0.000000e+00 : f32
    %88 = vector.broadcast %cst_34 : f32 to vector<24x128xf32>
    %89 = arith.maximumf %84, %88 : vector<24x128xf32>
    %90 = vector.shape_cast %87 : vector<1x128xi1> to vector<1x128xi1>
    %91 = vector.broadcast %90 : vector<1x128xi1> to vector<24x128xi1>
    %92 = arith.select %91, %89, %84 : vector<24x128xi1>, vector<24x128xf32>
    %c0_35 = arith.constant 0 : index
    %c0_36 = arith.constant 0 : index
    %93 = vector.load %arg13[%c0_35, %c0_36] : memref<128x384xbf16, #tpu.memory_space<vmem>>, vector<128x384xbf16>
    %94 = arith.truncf %92 : vector<24x128xf32> to vector<24x128xbf16>
    %cst_37 = arith.constant dense<0.000000e+00> : vector<24x384xf32>
    %95 = tpu.matmul %94, %93, %cst_37 {dimension_numbers = #tpu.dot_dimension_numbers<[1], [0], [0], [1], [0, 0, 1, 1], [], []>} : vector<24x128xbf16>, vector<128x384xbf16>, vector<24x384xf32> -> vector<24x384xf32>
    %c0_38 = arith.constant 0 : index
    %c0_39 = arith.constant 0 : index
    %96 = vector.load %arg14[%c0_38, %c0_39] : memref<1x384xf32, #tpu.memory_space<vmem>>, vector<1x384xf32>
    %97 = vector.broadcast %96 : vector<1x384xf32> to vector<24x384xf32>
    %98 = arith.addf %95, %97 : vector<24x384xf32>
    %c0_40 = arith.constant 0 : index
    %c0_41 = arith.constant 0 : index
    %99 = vector.load %arg15[%c0_40, %c0_41] : memref<1x384xf32, #tpu.memory_space<vmem>>, vector<1x384xf32>
    %cst_42 = arith.constant 0.000000e+00 : f32
    %100 = vector.broadcast %cst_42 : f32 to vector<1x384xf32>
    %101 = arith.cmpf ogt, %99, %100 : vector<1x384xf32>
    %cst_43 = arith.constant 0.000000e+00 : f32
    %102 = vector.broadcast %cst_43 : f32 to vector<24x384xf32>
    %103 = arith.maximumf %98, %102 : vector<24x384xf32>
    %104 = vector.shape_cast %101 : vector<1x384xi1> to vector<1x384xi1>
    %105 = vector.broadcast %104 : vector<1x384xi1> to vector<24x384xi1>
    %106 = arith.select %105, %103, %98 : vector<24x384xi1>, vector<24x384xf32>
    %107 = vector.extract_strided_slice %106 {offsets = [0, 0], sizes = [24, 128], strides = [1, 1]} : vector<24x384xf32> to vector<24x128xf32>
    %108 = vector.extract_strided_slice %106 {offsets = [0, 128], sizes = [24, 64], strides = [1, 1]} : vector<24x384xf32> to vector<24x64xf32>
    %109 = vector.extract_strided_slice %106 {offsets = [0, 192], sizes = [24, 64], strides = [1, 1]} : vector<24x384xf32> to vector<24x64xf32>
    %110 = vector.extract_strided_slice %106 {offsets = [0, 256], sizes = [24, 64], strides = [1, 1]} : vector<24x384xf32> to vector<24x64xf32>
    %111 = vector.extract_strided_slice %106 {offsets = [0, 320], sizes = [24, 1], strides = [1, 1]} : vector<24x384xf32> to vector<24x1xf32>
    %cst_44 = arith.constant 0.000000e+00 : f32
    %112 = vector.broadcast %cst_44 : f32 to vector<24x1xf32>
    %113 = arith.cmpf ogt, %111, %112 : vector<24x1xf32>
    %114 = arith.extui %113 : vector<24x1xi1> to vector<24x1xi32>
    %115 = arith.sitofp %114 : vector<24x1xi32> to vector<24x1xf32>
    %c0_45 = arith.constant 0 : index
    %c0_46 = arith.constant 0 : index
    %116 = vector.load %arg16[%c0_45, %c0_46] : memref<128x8xbf16, #tpu.memory_space<vmem>>, vector<128x8xbf16>
    %117 = arith.truncf %107 : vector<24x128xf32> to vector<24x128xbf16>
    %cst_47 = arith.constant dense<0.000000e+00> : vector<24x8xf32>
    %118 = tpu.matmul %117, %116, %cst_47 {dimension_numbers = #tpu.dot_dimension_numbers<[1], [0], [0], [1], [0, 0, 1, 1], [], []>} : vector<24x128xbf16>, vector<128x8xbf16>, vector<24x8xf32> -> vector<24x8xf32>
    %c0_48 = arith.constant 0 : index
    %c0_49 = arith.constant 0 : index
    %119 = vector.load %arg17[%c0_48, %c0_49] : memref<1x8xf32, #tpu.memory_space<vmem>>, vector<1x8xf32>
    %120 = vector.broadcast %119 : vector<1x8xf32> to vector<24x8xf32>
    %121 = arith.addf %118, %120 : vector<24x8xf32>
    %cst_50 = arith.constant dense<0xFF800000> : vector<24xf32>
    %122 = vector.multi_reduction <maximumf>, %121, %cst_50 [1] : vector<24x8xf32> to vector<24xf32>
    %123 = vector.shape_cast %122 : vector<24xf32> to vector<24x1xf32>
    %124 = vector.broadcast %123 : vector<24x1xf32> to vector<24x8xf32>
    %125 = arith.subf %121, %124 : vector<24x8xf32>
    %126 = math.exp %125 : vector<24x8xf32>
    %cst_51 = arith.constant dense<0.000000e+00> : vector<24xf32>
    %127 = vector.multi_reduction <add>, %126, %cst_51 [1] : vector<24x8xf32> to vector<24xf32>
    %128 = vector.shape_cast %127 : vector<24xf32> to vector<24x1xf32>
    %129 = tpu.reciprocal %128 {approx = true} : vector<24x1xf32> -> vector<24x1xf32>
    %130 = vector.broadcast %129 : vector<24x1xf32> to vector<24x8xf32>
    %131 = arith.mulf %126, %130 : vector<24x8xf32>
    %c0_52 = arith.constant 0 : index
    %c0_53 = arith.constant 0 : index
    %132 = vector.load %arg18[%c0_52, %c0_53] : memref<64x128xbf16, #tpu.memory_space<vmem>>, vector<64x128xbf16>
    %133 = arith.truncf %18 : vector<8x64xf32> to vector<8x64xbf16>
    %cst_54 = arith.constant dense<0.000000e+00> : vector<8x128xf32>
    %134 = tpu.matmul %133, %132, %cst_54 {dimension_numbers = #tpu.dot_dimension_numbers<[1], [0], [0], [1], [0, 0, 1, 1], [], []>} : vector<8x64xbf16>, vector<64x128xbf16>, vector<8x128xf32> -> vector<8x128xf32>
    %c0_55 = arith.constant 0 : index
    %c0_56 = arith.constant 0 : index
    %135 = vector.load %arg19[%c0_55, %c0_56] : memref<1x128xf32, #tpu.memory_space<vmem>>, vector<1x128xf32>
    %136 = vector.broadcast %135 : vector<1x128xf32> to vector<8x128xf32>
    %137 = arith.addf %134, %136 : vector<8x128xf32>
    %138 = vector.extract_strided_slice %137 {offsets = [0, 0], sizes = [8, 64], strides = [1, 1]} : vector<8x128xf32> to vector<8x64xf32>
    %139 = vector.extract_strided_slice %137 {offsets = [0, 64], sizes = [8, 64], strides = [1, 1]} : vector<8x128xf32> to vector<8x64xf32>
    %140 = tpu.iota {dimensions = array<i32: 0>} : vector<24x24xi32>
    %141 = tpu.iota {dimensions = array<i32: 1>} : vector<24x24xi32>
    %142 = arith.cmpi eq, %140, %141 : vector<24x24xi32>
    %143 = arith.extui %142 : vector<24x24xi1> to vector<24x24xi32>
    %144 = arith.sitofp %143 : vector<24x24xi32> to vector<24x24xf32>
    %145 = vector.broadcast %115 : vector<24x1xf32> to vector<24x24xf32>
    %146 = arith.mulf %144, %145 : vector<24x24xf32>
    %cst_57 = arith.constant dense<0.000000e+00> : vector<24xf32>
    %147 = vector.multi_reduction <add>, %146, %cst_57 [0] : vector<24x24xf32> to vector<24xf32>
    %148 = vector.shape_cast %147 : vector<24xf32> to vector<1x24xf32>
    %149 = tpu.iota {dimensions = array<i32: 0>} : vector<8x24xi32>
    %c0_58 = arith.constant 0 : index
    %c0_59 = arith.constant 0 : index
    %150 = vector.load %arg5[%c0_58, %c0_59] : memref<1x24xi32, #tpu.memory_space<vmem>>, vector<1x24xi32>
    %151 = vector.broadcast %150 : vector<1x24xi32> to vector<8x24xi32>
    %152 = arith.cmpi eq, %149, %151 : vector<8x24xi32>
    %153 = arith.extui %152 : vector<8x24xi1> to vector<8x24xi32>
    %154 = arith.sitofp %153 : vector<8x24xi32> to vector<8x24xf32>
    %155 = tpu.iota {dimensions = array<i32: 0>} : vector<8x24xi32>
    %c0_60 = arith.constant 0 : index
    %c0_61 = arith.constant 0 : index
    %156 = vector.load %arg6[%c0_60, %c0_61] : memref<1x24xi32, #tpu.memory_space<vmem>>, vector<1x24xi32>
    %157 = vector.broadcast %156 : vector<1x24xi32> to vector<8x24xi32>
    %158 = arith.cmpi eq, %155, %157 : vector<8x24xi32>
    %159 = arith.extui %158 : vector<8x24xi1> to vector<8x24xi32>
    %160 = arith.sitofp %159 : vector<8x24xi32> to vector<8x24xf32>
    %161 = vector.broadcast %148 : vector<1x24xf32> to vector<8x24xf32>
    %162 = arith.mulf %154, %161 : vector<8x24xf32>
    %163 = vector.broadcast %148 : vector<1x24xf32> to vector<8x24xf32>
    %164 = arith.mulf %160, %163 : vector<8x24xf32>
    %165 = vector.shape_cast %139 : vector<8x64xf32> to vector<8x1x64xf32>
    %166 = vector.shape_cast %110 : vector<24x64xf32> to vector<1x24x64xf32>
    %167 = vector.broadcast %165 : vector<8x1x64xf32> to vector<8x24x64xf32>
    %168 = vector.broadcast %166 : vector<1x24x64xf32> to vector<8x24x64xf32>
    %169 = arith.addf %167, %168 : vector<8x24x64xf32>
    %cst_62 = arith.constant 0.000000e+00 : f32
    %170 = vector.broadcast %cst_62 : f32 to vector<8x24x64xf32>
    %171 = arith.maximumf %169, %170 : vector<8x24x64xf32>
    %c0_63 = arith.constant 0 : index
    %c0_64 = arith.constant 0 : index
    %172 = vector.load %arg20[%c0_63, %c0_64] : memref<1x64xf32, #tpu.memory_space<vmem>>, vector<1x64xf32>
    %173 = vector.shape_cast %172 : vector<1x64xf32> to vector<1x1x64xf32>
    %174 = vector.broadcast %173 : vector<1x1x64xf32> to vector<8x24x64xf32>
    %175 = arith.mulf %171, %174 : vector<8x24x64xf32>
    %cst_65 = arith.constant dense<0.000000e+00> : vector<8x24xf32>
    %176 = vector.multi_reduction <add>, %175, %cst_65 [2] : vector<8x24x64xf32> to vector<8x24xf32>
    %cst_66 = arith.constant 0.000000e+00 : f32
    %177 = vector.broadcast %cst_66 : f32 to vector<8x24xf32>
    %178 = arith.cmpf ogt, %162, %177 : vector<8x24xf32>
    %cst_67 = arith.constant -1.000000e+30 : f32
    %179 = vector.broadcast %cst_67 : f32 to vector<8x24xf32>
    %180 = arith.select %178, %176, %179 : vector<8x24xi1>, vector<8x24xf32>
    %cst_68 = arith.constant dense<0xFF800000> : vector<8xf32>
    %181 = vector.multi_reduction <maximumf>, %180, %cst_68 [1] : vector<8x24xf32> to vector<8xf32>
    %182 = vector.shape_cast %181 : vector<8xf32> to vector<8x1xf32>
    %183 = vector.broadcast %182 : vector<8x1xf32> to vector<8x24xf32>
    %184 = arith.subf %180, %183 : vector<8x24xf32>
    %185 = math.exp %184 : vector<8x24xf32>
    %186 = arith.mulf %185, %162 : vector<8x24xf32>
    %cst_69 = arith.constant dense<0.000000e+00> : vector<8xf32>
    %187 = vector.multi_reduction <add>, %186, %cst_69 [1] : vector<8x24xf32> to vector<8xf32>
    %188 = vector.shape_cast %187 : vector<8xf32> to vector<8x1xf32>
    %cst_70 = arith.constant 9.99999968E-21 : f32
    %189 = vector.broadcast %cst_70 : f32 to vector<8x1xf32>
    %190 = arith.maximumf %188, %189 : vector<8x1xf32>
    %191 = tpu.reciprocal %190 {approx = true} : vector<8x1xf32> -> vector<8x1xf32>
    %192 = vector.broadcast %191 : vector<8x1xf32> to vector<8x24xf32>
    %193 = arith.mulf %186, %192 : vector<8x24xf32>
    %cst_71 = arith.constant 0.000000e+00 : f32
    %194 = vector.broadcast %cst_71 : f32 to vector<8x24xf32>
    %195 = arith.cmpf ogt, %164, %194 : vector<8x24xf32>
    %cst_72 = arith.constant -1.000000e+30 : f32
    %196 = vector.broadcast %cst_72 : f32 to vector<8x24xf32>
    %197 = arith.select %195, %176, %196 : vector<8x24xi1>, vector<8x24xf32>
    %cst_73 = arith.constant dense<0xFF800000> : vector<8xf32>
    %198 = vector.multi_reduction <maximumf>, %197, %cst_73 [1] : vector<8x24xf32> to vector<8xf32>
    %199 = vector.shape_cast %198 : vector<8xf32> to vector<8x1xf32>
    %200 = vector.broadcast %199 : vector<8x1xf32> to vector<8x24xf32>
    %201 = arith.subf %197, %200 : vector<8x24xf32>
    %202 = math.exp %201 : vector<8x24xf32>
    %203 = arith.mulf %202, %164 : vector<8x24xf32>
    %cst_74 = arith.constant dense<0.000000e+00> : vector<8xf32>
    %204 = vector.multi_reduction <add>, %203, %cst_74 [1] : vector<8x24xf32> to vector<8xf32>
    %205 = vector.shape_cast %204 : vector<8xf32> to vector<8x1xf32>
    %cst_75 = arith.constant 9.99999968E-21 : f32
    %206 = vector.broadcast %cst_75 : f32 to vector<8x1xf32>
    %207 = arith.maximumf %205, %206 : vector<8x1xf32>
    %208 = tpu.reciprocal %207 {approx = true} : vector<8x1xf32> -> vector<8x1xf32>
    %209 = vector.broadcast %208 : vector<8x1xf32> to vector<8x24xf32>
    %210 = arith.mulf %203, %209 : vector<8x24xf32>
    %211 = arith.truncf %193 : vector<8x24xf32> to vector<8x24xbf16>
    %212 = arith.truncf %108 : vector<24x64xf32> to vector<24x64xbf16>
    %cst_76 = arith.constant dense<0.000000e+00> : vector<8x64xf32>
    %213 = tpu.matmul %211, %212, %cst_76 {dimension_numbers = #tpu.dot_dimension_numbers<[1], [0], [0], [1], [0, 0, 1, 1], [], []>} : vector<8x24xbf16>, vector<24x64xbf16>, vector<8x64xf32> -> vector<8x64xf32>
    %214 = arith.truncf %210 : vector<8x24xf32> to vector<8x24xbf16>
    %215 = arith.truncf %109 : vector<24x64xf32> to vector<24x64xbf16>
    %cst_77 = arith.constant dense<0.000000e+00> : vector<8x64xf32>
    %216 = tpu.matmul %214, %215, %cst_77 {dimension_numbers = #tpu.dot_dimension_numbers<[1], [0], [0], [1], [0, 0, 1, 1], [], []>} : vector<8x24xbf16>, vector<24x64xbf16>, vector<8x64xf32> -> vector<8x64xf32>
    %217 = arith.addf %213, %216 : vector<8x64xf32>
    %218 = arith.addf %138, %217 : vector<8x64xf32>
    %cst_78 = arith.constant 0.000000e+00 : f32
    %219 = vector.broadcast %cst_78 : f32 to vector<8x64xf32>
    %220 = arith.maximumf %218, %219 : vector<8x64xf32>
    %cst_79 = arith.constant dense<0.000000e+00> : vector<8xf32>
    %221 = vector.multi_reduction <add>, %162, %cst_79 [1] : vector<8x24xf32> to vector<8xf32>
    %222 = vector.shape_cast %221 : vector<8xf32> to vector<8x1xf32>
    %cst_80 = arith.constant 0.000000e+00 : f32
    %223 = vector.broadcast %cst_80 : f32 to vector<8x1xf32>
    %224 = arith.cmpf ogt, %222, %223 : vector<8x1xf32>
    %225 = vector.shape_cast %224 : vector<8x1xi1> to vector<8x1xi1>
    %226 = vector.broadcast %225 : vector<8x1xi1> to vector<8x64xi1>
    %227 = arith.select %226, %220, %18 : vector<8x64xi1>, vector<8x64xf32>
    %c0_81 = arith.constant 0 : index
    %c0_82 = arith.constant 0 : index
    %228 = vector.load %arg21[%c0_81, %c0_82] : memref<64x8xbf16, #tpu.memory_space<vmem>>, vector<64x8xbf16>
    %229 = arith.truncf %227 : vector<8x64xf32> to vector<8x64xbf16>
    %cst_83 = arith.constant dense<0.000000e+00> : vector<8x8xf32>
    %230 = tpu.matmul %229, %228, %cst_83 {dimension_numbers = #tpu.dot_dimension_numbers<[1], [0], [0], [1], [0, 0, 1, 1], [], []>} : vector<8x64xbf16>, vector<64x8xbf16>, vector<8x8xf32> -> vector<8x8xf32>
    %c0_84 = arith.constant 0 : index
    %c0_85 = arith.constant 0 : index
    %231 = vector.load %arg22[%c0_84, %c0_85] : memref<1x8xf32, #tpu.memory_space<vmem>>, vector<1x8xf32>
    %232 = vector.broadcast %231 : vector<1x8xf32> to vector<8x8xf32>
    %233 = arith.addf %230, %232 : vector<8x8xf32>
    %234 = tpu.iota {dimensions = array<i32: 1>} : vector<8x8xi32>
    %c1_i32_86 = arith.constant 1 : i32
    %235 = vector.broadcast %c1_i32_86 : i32 to vector<8x8xi32>
    %236 = arith.cmpi sge, %234, %235 : vector<8x8xi32>
    %cst_87 = arith.constant -1.000000e+30 : f32
    %237 = vector.broadcast %cst_87 : f32 to vector<8x8xf32>
    %238 = arith.select %236, %233, %237 : vector<8x8xi1>, vector<8x8xf32>
    %cst_88 = arith.constant dense<0xFF800000> : vector<8xf32>
    %239 = vector.multi_reduction <maximumf>, %238, %cst_88 [1] : vector<8x8xf32> to vector<8xf32>
    %240 = vector.shape_cast %239 : vector<8xf32> to vector<8x1xf32>
    %241 = vector.broadcast %240 : vector<8x1xf32> to vector<8x8xf32>
    %242 = arith.cmpf oeq, %238, %241 : vector<8x8xf32>
    %c8_i32_89 = arith.constant 8 : i32
    %243 = vector.broadcast %c8_i32_89 : i32 to vector<8x8xi32>
    %244 = arith.select %242, %234, %243 : vector<8x8xi1>, vector<8x8xi32>
    %cst_90 = arith.constant dense<2147483647> : vector<8xi32>
    %245 = vector.multi_reduction <minsi>, %244, %cst_90 [1] : vector<8x8xi32> to vector<8xi32>
    %246 = vector.shape_cast %245 : vector<8xi32> to vector<8x1xi32>
    %247 = vector.broadcast %240 : vector<8x1xf32> to vector<8x8xf32>
    %248 = arith.subf %238, %247 : vector<8x8xf32>
    %249 = math.exp %248 : vector<8x8xf32>
    %cst_91 = arith.constant 0.000000e+00 : f32
    %250 = vector.broadcast %cst_91 : f32 to vector<8x8xf32>
    %251 = arith.select %236, %249, %250 : vector<8x8xi1>, vector<8x8xf32>
    %cst_92 = arith.constant dense<0.000000e+00> : vector<8xf32>
    %252 = vector.multi_reduction <add>, %251, %cst_92 [1] : vector<8x8xf32> to vector<8xf32>
    %253 = vector.shape_cast %252 : vector<8xf32> to vector<8x1xf32>
    %254 = tpu.reciprocal %253 {approx = true} : vector<8x1xf32> -> vector<8x1xf32>
    %255 = vector.broadcast %254 : vector<8x1xf32> to vector<8x8xf32>
    %256 = arith.mulf %251, %255 : vector<8x8xf32>
    %cst_93 = arith.constant dense<0xFF800000> : vector<8xf32>
    %257 = vector.multi_reduction <maximumf>, %256, %cst_93 [1] : vector<8x8xf32> to vector<8xf32>
    %258 = vector.shape_cast %257 : vector<8xf32> to vector<8x1xf32>
    %cst_94 = arith.constant 0.000000e+00 : f32
    %259 = vector.broadcast %cst_94 : f32 to vector<8x128xf32>
    %c0_95 = arith.constant 0 : index
    %c0_96 = arith.constant 0 : index
    %260 = vector.load %arg23[%c0_95, %c0_96] : memref<8x128xf32, #tpu.memory_space<vmem>>, vector<8x128xf32>
    tpu.vector_store %arg23[%c0_95, %c0_96], %259 {strides = array<i32>} : memref<8x128xf32, #tpu.memory_space<vmem>>, vector<8x128xf32>,
    %c0_97 = arith.constant 0 : index
    %c0_98 = arith.constant 0 : index
    %261 = vector.load %arg23[%c0_97, %c0_98] : memref<8x128xf32, #tpu.memory_space<vmem>>, vector<8x1xf32>
    tpu.vector_store %arg23[%c0_97, %c0_98], %258 {strides = array<i32>} : memref<8x128xf32, #tpu.memory_space<vmem>>, vector<8x1xf32>,
    %262 = arith.sitofp %246 : vector<8x1xi32> to vector<8x1xf32>
    %c0_99 = arith.constant 0 : index
    %c1 = arith.constant 1 : index
    %263 = vector.load %arg23[%c0_99, %c1] : memref<8x128xf32, #tpu.memory_space<vmem>>, vector<8x1xf32>
    tpu.vector_store %arg23[%c0_99, %c1], %262 {strides = array<i32>} : memref<8x128xf32, #tpu.memory_space<vmem>>, vector<8x1xf32>,
    %cst_100 = arith.constant 0.000000e+00 : f32
    %264 = vector.broadcast %cst_100 : f32 to vector<24x128xf32>
    %c0_101 = arith.constant 0 : index
    %c0_102 = arith.constant 0 : index
    %265 = vector.load %arg24[%c0_101, %c0_102] : memref<24x128xf32, #tpu.memory_space<vmem>>, vector<24x128xf32>
    tpu.vector_store %arg24[%c0_101, %c0_102], %264 {strides = array<i32>} : memref<24x128xf32, #tpu.memory_space<vmem>>, vector<24x128xf32>,
    %c0_103 = arith.constant 0 : index
    %c0_104 = arith.constant 0 : index
    %266 = vector.load %arg24[%c0_103, %c0_104] : memref<24x128xf32, #tpu.memory_space<vmem>>, vector<24x8xf32>
    tpu.vector_store %arg24[%c0_103, %c0_104], %131 {strides = array<i32>} : memref<24x128xf32, #tpu.memory_space<vmem>>, vector<24x8xf32>,
    %c0_105 = arith.constant 0 : index
    %c8 = arith.constant 8 : index
    %267 = vector.load %arg24[%c0_105, %c8] : memref<24x128xf32, #tpu.memory_space<vmem>>, vector<24x1xf32>
    tpu.vector_store %arg24[%c0_105, %c8], %115 {strides = array<i32>} : memref<24x128xf32, #tpu.memory_space<vmem>>, vector<24x1xf32>,
    return
  }
}

</mosaic_0001>

<llo_original>
// kernel: forward_core.1
$region0: #{forward_core.1}
  #allocation0 [shape = 'u32[]', space=smem, size = 0x4, offset = 0x4, fixed_abs, tag = 'smem constant byte address 0x4 - core index']
  #allocation1 [shape = 'u32[72,128]{1,0:T(1,128)}', space=vmem, size = 0x9000, scoped, tag = 'internal scratch']
  %s0 = inlined_call_operand.vmem [shape: f32[2,3], index: 0, kind: input, shape index: {}]
  %s1 = inlined_call_operand.vmem [shape: f32[8,4], index: 1, kind: input, shape index: {}]
  %s2 = inlined_call_operand.vmem [shape: s32[8,1], index: 2, kind: input, shape index: {}]
  %s3 = inlined_call_operand.vmem [shape: s32[24,1], index: 3, kind: input, shape index: {}]
  %s4 = inlined_call_operand.vmem [shape: s32[24,1], index: 4, kind: input, shape index: {}]
  %s5 = inlined_call_operand.vmem [shape: s32[1,24], index: 5, kind: input, shape index: {}]
  %s6 = inlined_call_operand.vmem [shape: s32[1,24], index: 6, kind: input, shape index: {}]
  %s7 = inlined_call_operand.vmem [shape: bf16[7,128], index: 7, kind: input, shape index: {}]
  %s8 = inlined_call_operand.vmem [shape: f32[1,128], index: 8, kind: input, shape index: {}]
  %s9 = inlined_call_operand.vmem [shape: f32[8,32], index: 9, kind: input, shape index: {}]
  %s10 = inlined_call_operand.vmem [shape: bf16[79,128], index: 10, kind: input, shape index: {}]
  %s11 = inlined_call_operand.vmem [shape: f32[1,128], index: 11, kind: input, shape index: {}]
  %s12 = inlined_call_operand.vmem [shape: f32[1,128], index: 12, kind: input, shape index: {}]
  %s13 = inlined_call_operand.hbm [shape: bf16[128,384], index: 13, kind: input, shape index: {}]
  %s14 = inlined_call_operand.vmem [shape: f32[1,384], index: 14, kind: input, shape index: {}]
  %s15 = inlined_call_operand.vmem [shape: f32[1,384], index: 15, kind: input, shape index: {}]
  %s16 = inlined_call_operand.vmem [shape: bf16[128,8], index: 16, kind: input, shape index: {}]
  %s17 = inlined_call_operand.vmem [shape: f32[1,8], index: 17, kind: input, shape index: {}]
  %s18 = inlined_call_operand.vmem [shape: bf16[64,128], index: 18, kind: input, shape index: {}]
  %s19 = inlined_call_operand.vmem [shape: f32[1,128], index: 19, kind: input, shape index: {}]
  %s20 = inlined_call_operand.vmem [shape: f32[1,64], index: 20, kind: input, shape index: {}]
  %s21 = inlined_call_operand.vmem [shape: bf16[64,8], index: 21, kind: input, shape index: {}]
  %s22 = inlined_call_operand.vmem [shape: f32[1,8], index: 22, kind: input, shape index: {}]
  %s23 = inlined_call_operand.vmem [shape: f32[8,128], index: 23, kind: output, shape index: {0}]
  %s24 = inlined_call_operand.vmem [shape: f32[24,128], index: 24, kind: output, shape index: {1}]
  %25 = xla_tuple %s23, %s24
  %s26 = sld [smem:[#allocation0]]
  $region114: #{forward_core.1} parent=0
    _
  %s28 = ssub.s32 1, %s26
  %s29 = scalar_select 0, %s28, %s26
  $region1: #{forward_core.1} parent=0
    #allocation2 [shape = 'u8[98304]{0}', space=vmem, size = 0x18000, scoped, tag = 'input window, operand 13, single buffered']
    #allocation3 [shape = 's32[1]{0}', space=sflag, size = 0x4, scoped, tag = 'scoped memory for forward_core.1']
    %30 = vsyncpa [#allocation3], 0
    // Predicated region
    $region2: #{forward_core.1} parent=1 // pred_check
      _
    $region3: #{forward_core.1} parent=1 // pred_check_branch
      %32 = sbr.rel (0) target = $region5
    $region4: #{forward_core.1} parent=1 // pred_region
      _
    $region5: #{forward_core.1} parent=1 // pred_fallthru
      _
    // Predicated region
    $region6: #{forward_core.1} parent=1 // pred_check
      _
    $region7: #{forward_core.1} parent=1 // pred_check_branch
      %34 = sbr.rel (0) target = $region9
    $region8: #{forward_core.1} parent=1 // pred_region
      _
    $region9: #{forward_core.1} parent=1 // pred_fallthru
      _
    // Predicated region
    $region10: #{forward_core.1} parent=1 // pred_check
      _
    $region11: #{forward_core.1} parent=1 // pred_check_branch
      %36 = sbr.rel (0) target = $region13
    $region12: #{forward_core.1} parent=1 // pred_region
      _
    $region13: #{forward_core.1} parent=1 // pred_fallthru
      _
    // Predicated region
    $region14: #{forward_core.1} parent=1 // pred_check
      _
    $region15: #{forward_core.1} parent=1 // pred_check_branch
      %38 = sbr.rel (0) target = $region17
    $region16: #{forward_core.1} parent=1 // pred_region
      _
    $region17: #{forward_core.1} parent=1 // pred_fallthru
      _
    // Predicated region
    $region18: #{forward_core.1} parent=1 // pred_check
      _
    $region19: #{forward_core.1} parent=1 // pred_check_branch
      %40 = sbr.rel (0) target = $region21
    $region20: #{forward_core.1} parent=1 // pred_region
      _
    $region21: #{forward_core.1} parent=1 // pred_fallthru
      _
    // Predicated region
    $region22: #{forward_core.1} parent=1 // pred_check
      _
    $region23: #{forward_core.1} parent=1 // pred_check_branch
      %42 = sbr.rel (0) target = $region25
    $region24: #{forward_core.1} parent=1 // pred_region
      _
    $region25: #{forward_core.1} parent=1 // pred_fallthru
      _
    // Predicated region
    $region26: #{forward_core.1} parent=1 // pred_check
      _
    $region27: #{forward_core.1} parent=1 // pred_check_branch
      %44 = sbr.rel (0) target = $region29
    $region28: #{forward_core.1} parent=1 // pred_region
      _
    $region29: #{forward_core.1} parent=1 // pred_fallthru
      _
    // Predicated region
    $region30: #{forward_core.1} parent=1 // pred_check
      _
    $region31: #{forward_core.1} parent=1 // pred_check_branch
      %46 = sbr.rel (0) target = $region33
    $region32: #{forward_core.1} parent=1 // pred_region
      _
    $region33: #{forward_core.1} parent=1 // pred_fallthru
      _
    // Predicated region
    $region34: #{forward_core.1} parent=1 // pred_check
      _
    $region35: #{forward_core.1} parent=1 // pred_check_branch
      %48 = sbr.rel (0) target = $region37
    $region36: #{forward_core.1} parent=1 // pred_region
      _
    $region37: #{forward_core.1} parent=1 // pred_fallthru
      _
    // Predicated region
    $region38: #{forward_core.1} parent=1 // pred_check
      _
    $region39: #{forward_core.1} parent=1 // pred_check_branch
      %50 = sbr.rel (0) target = $region41
    $region40: #{forward_core.1} parent=1 // pred_region
      _
    $region41: #{forward_core.1} parent=1 // pred_fallthru
      _
    // Predicated region
    $region42: #{forward_core.1} parent=1 // pred_check
      _
    $region43: #{forward_core.1} parent=1 // pred_check_branch
      %52 = sbr.rel (0) target = $region45
    $region44: #{forward_core.1} parent=1 // pred_region
      _
    $region45: #{forward_core.1} parent=1 // pred_fallthru
      _
    // Predicated region
    $region46: #{forward_core.1} parent=1 // pred_check
      _
    $region47: #{forward_core.1} parent=1 // pred_check_branch
      %54 = sbr.rel (0) target = $region49
    $region48: #{forward_core.1} parent=1 // pred_region
      _
    $region49: #{forward_core.1} parent=1 // pred_fallthru
      _
    // Predicated region
    $region50: #{forward_core.1} parent=1 // pred_check
      _
    $region51: #{forward_core.1} parent=1 // pred_check_branch
      %56 = sbr.rel (0) target = $region53
    $region52: #{forward_core.1} parent=1 // pred_region
      _
    $region53: #{forward_core.1} parent=1 // pred_fallthru
      _
    // Predicated region
    $region54: #{forward_core.1} parent=1 // pred_check
      _
    $region55: #{forward_core.1} parent=1 // pred_check_branch
      %58 = sbr.rel (0) target = $region57
    $region56: #{forward_core.1} parent=1 // pred_region
      %60 = vsyncadd [#allocation3], 0
      %s61 = sshll.u32 %s13, 4
      %s62 = int_to_ptr.hbm [resolvable:$true] %s61
      %s63 = sshll.u32 [#allocation2], 4
      %s64 = int_to_ptr.vmem [resolvable:$true] %s63
      %69 = dma.hbm_to_vmem [thread:$0]  %s62, 3072, %s64, [#allocation3], 192, 192, 12
    $region57: #{forward_core.1} parent=1 // pred_fallthru
      _
    // Predicated region
    $region58: #{forward_core.1} parent=1 // pred_check
      _
    $region59: #{forward_core.1} parent=1 // pred_check_branch
      %71 = sbr.rel (0) target = $region61
    $region60: #{forward_core.1} parent=1 // pred_region
      _
    $region61: #{forward_core.1} parent=1 // pred_fallthru
      _
    // Predicated region
    $region62: #{forward_core.1} parent=1 // pred_check
      _
    $region63: #{forward_core.1} parent=1 // pred_check_branch
      %73 = sbr.rel (0) target = $region65
    $region64: #{forward_core.1} parent=1 // pred_region
      _
    $region65: #{forward_core.1} parent=1 // pred_fallthru
      _
    // Predicated region
    $region66: #{forward_core.1} parent=1 // pred_check
      _
    $region67: #{forward_core.1} parent=1 // pred_check_branch
      %75 = sbr.rel (0) target = $region69
    $region68: #{forward_core.1} parent=1 // pred_region
      _
    $region69: #{forward_core.1} parent=1 // pred_fallthru
      _
    // Predicated region
    $region70: #{forward_core.1} parent=1 // pred_check
      _
    $region71: #{forward_core.1} parent=1 // pred_check_branch
      %77 = sbr.rel (0) target = $region73
    $region72: #{forward_core.1} parent=1 // pred_region
      _
    $region73: #{forward_core.1} parent=1 // pred_fallthru
      _
    // Predicated region
    $region74: #{forward_core.1} parent=1 // pred_check
      _
    $region75: #{forward_core.1} parent=1 // pred_check_branch
      %79 = sbr.rel (0) target = $region77
    $region76: #{forward_core.1} parent=1 // pred_region
      _
    $region77: #{forward_core.1} parent=1 // pred_fallthru
      _
    // Predicated region
    $region78: #{forward_core.1} parent=1 // pred_check
      _
    $region79: #{forward_core.1} parent=1 // pred_check_branch
      %81 = sbr.rel (0) target = $region81
    $region80: #{forward_core.1} parent=1 // pred_region
      _
    $region81: #{forward_core.1} parent=1 // pred_fallthru
      _
    // Predicated region
    $region82: #{forward_core.1} parent=1 // pred_check
      _
    $region83: #{forward_core.1} parent=1 // pred_check_branch
      %83 = sbr.rel (0) target = $region85
    $region84: #{forward_core.1} parent=1 // pred_region
      _
    $region85: #{forward_core.1} parent=1 // pred_fallthru
      _
    // Predicated region
    $region86: #{forward_core.1} parent=1 // pred_check
      _
    $region87: #{forward_core.1} parent=1 // pred_check_branch
      %85 = sbr.rel (0) target = $region89
    $region88: #{forward_core.1} parent=1 // pred_region
      _
    $region89: #{forward_core.1} parent=1 // pred_fallthru
      _
    // Predicated region
    $region90: #{forward_core.1} parent=1 // pred_check
      _
    $region91: #{forward_core.1} parent=1 // pred_check_branch
      %87 = sbr.rel (0) target = $region93
    $region92: #{forward_core.1} parent=1 // pred_region
      _
    $region93: #{forward_core.1} parent=1 // pred_fallthru
      _
    // Predicated region
    $region94: #{forward_core.1} parent=1 // pred_check
      _
    $region95: #{forward_core.1} parent=1 // pred_check_branch
      %89 = sbr.rel (0) target = $region97
    $region96: #{forward_core.1} parent=1 // pred_region
      %91 = dma.done [#allocation3], 3072
    $region97: #{forward_core.1} parent=1 // pred_fallthru
      _
    %v93 = vlaneseq
    %v94 = vand.u32 %v93, 127
    %v95 = vld [vmem:[%s2] sm:$0xff]
    %96 = vset.pattern.permute.xlu0 0
    %97 = vperm.xlu0 %96, %v95
    %v98 = vpop.permute.xlu0 %97
    %vm99 = vcmp.eq.s32.totalorder %v94, %v98
    %v100 = vsel %vm99, 1, 0
    %v101 = vcvt.s32.f32 %v100
    %v102 = vld [vmem:[%s0] sm:$0x3]
    %vm103 = vcmask 15360
    %v105 = vsel %vm103, %v101, 0
    %vm107 = vcmask 1041408
    %v109 = vsel %vm107, %v102, 0
    %111 = vmatpush.msra.mxu0 0.0
    %112 = vmatpush.msra.mxu0 0.0
    %113 = vmatpush.msra.mxu0 0.0
    %114 = vmatpush.msra.mxu0 0.0
    %115 = vmatpush.msra.mxu0 0.0
    %116 = vmatpush.msra.mxu0 0.0
    %117 = vmatpush.msra.mxu0 0.0
    %118 = vmatpush.msra.mxu0 0.0
    %119 = vmatpush.msra.mxu0 0.0
    %120 = vmatpush.msra.mxu0 0.0
    %121 = vmatpush.msra.mxu0 0.0
    %122 = vmatpush.msra.mxu0 0.0
    %123 = vmatpush.msra.mxu0 0.0
    %124 = vmatpush.msra.mxu0 0.0
    %125 = vmatpush.msra.mxu0 0.0
    %126 = vmatpush.msra.mxu0 %v109
    %127 = vmatmul.f32.gmra.mxu0 %v105
    %v128 = vpop.f32.mrf.mxu0
    %v129 = vadd.f32 0.0, %v128
    %130 = vdwg.mxu0
    %v131 = vld [vmem:[%s1] sm:$0xff]
    %v132 = vmul.f32 %v131, 0.0625
    %134 = vrot.lane.b32.xlu0 %v132, 3
    %v135 = vpop.permute.xlu0 %134
    %vm137 = vcmask 23552
    %v138 = vsel %vm137, %v129, %v135
    %v139 = vld [vmem:[%s7] sm:$0xf]
    %v140 = vpack.c.bf16 %v138, %v138
    %v141 = vld [vmem:[%s8] sm:$0x1]
    %v143 = vperm.slane %v141, 0
    %vm145 = vcmask 56320
    %v147 = vsel %vm145, %v140, 0
    %vm149 = vcmask 1042432
    %vm150 = vcmask 1043456
    %v151 = vsel %vm149, 4294967295, 65535
    %v152 = vsel %vm150, %v151, 0
    %v154 = vand.u32 %v139, %v152
    %156 = vmatpush.bf16.msra.mxu0 0
    %157 = vmatpush.bf16.msra.mxu0 0
    %158 = vmatpush.bf16.msra.mxu0 0
    %159 = vmatpush.bf16.msra.mxu0 0
    %160 = vmatpush.bf16.msra.mxu0 0
    %161 = vmatpush.bf16.msra.mxu0 0
    %162 = vmatpush.bf16.msra.mxu0 0
    %163 = vmatpush.bf16.msra.mxu0 %v154
    %164 = vmatmul.bf16.gmra.mxu0 %v147
    %v165 = vpop.f32.mrf.mxu0
    %v166 = vadd.f32 %v143, %v165
    %v167 = vpop.f32.mrf.mxu0
    %168 = vdwg.mxu0
    %vm169 = vcmp.ge.s32.totalorder %v94, 1
    %171 = vrot.lane.b32.xlu0 %v166, 64
    %v172 = vpop.permute.xlu0 %171
    %v174 = vsel %vm169, %v172, -1e+30
    %vm175 = vcmask 64512
    %v176 = vsel %vm175, %v174, -inf
    %177 = vmax.xlane.f32.xlu0 %v176
    %v178 = vpop.xlane.xlu0 %177
    %vm179 = vcmp.eq.f32.partialorder %v174, %v178
    %v180 = vsel %vm179, %v94, 8
    %v181 = vsel %vm175, %v180, 2147483647
    %v182 = vand.u32 %v181, 65535
    %v183 = vshra.s32 %v181, 16
    %v184 = vcvt.s32.f32 %v182
    %v185 = vcvt.s32.f32 %v183
    %186 = vmin.xlane.f32.xlu0 %v185
    %v187 = vpop.xlane.xlu0 %186
    %vm188 = vcmp.eq.f32.partialorder %v185, %v187
    %v189 = vsel %vm188, %v184, inf
    %190 = vmin.xlane.f32.xlu0 %v189
    %v191 = vpop.xlane.xlu0 %190
    %v192 = vcvt.f32.s32 %v191
    %v193 = vcvt.f32.s32 %v187
    %v194 = vshll.u32 %v193, 16
    %v195 = vadd.s32 %v194, %v192
    %vm196 = vcmp.eq.s32.totalorder %v94, %v195
    %v197 = vsel %vm196, 1, 0
    %v198 = vcvt.s32.f32 %v197
    %v199 = vld [vmem:[%s9] sm:$0xff]
    %v201 = vsel %vm175, %v198, 0
    %203 = vmatpush.msra.mxu0 0.0
    %204 = vmatpush.msra.mxu0 0.0
    %205 = vmatpush.msra.mxu0 0.0
    %206 = vmatpush.msra.mxu0 0.0
    %207 = vmatpush.msra.mxu0 0.0
    %208 = vmatpush.msra.mxu0 0.0
    %209 = vmatpush.msra.mxu0 0.0
    %210 = vmatpush.msra.mxu0 0.0
    %211 = vmatpush.msra.mxu0 0.0
    %212 = vmatpush.msra.mxu0 0.0
    %213 = vmatpush.msra.mxu0 0.0
    %214 = vmatpush.msra.mxu0 0.0
    %215 = vmatpush.msra.mxu0 0.0
    %216 = vmatpush.msra.mxu0 0.0
    %217 = vmatpush.msra.mxu0 0.0
    %218 = vmatpush.msra.mxu0 %v199
    %219 = vmatmul.f32.gmra.mxu0 %v201
    %v220 = vpop.f32.mrf.mxu0
    %v221 = vadd.f32 0.0, %v220
    %222 = vdwg.mxu0
    %224 = vrot.lane.b32.xlu0 %v131, 2
    %v225 = vpop.permute.xlu0 %224
    %v227 = vsub.f32 %v131, %v225
    %v228 = vadd.f32 %v227, 1.0
    %v229 = vsub.f32 %v228, 1.0
    %v230 = vmul.f32 %v229, 0.5
    %232 = vrot.lane.b32.xlu0 %v230, 126
    %v233 = vpop.permute.xlu0 %232
    %v235 = vadd.f32 %v131, %v233
    %237 = vrot.lane.b32.xlu0 %v235, 7
    %v238 = vpop.permute.xlu0 %237
    %241 = vrot.lane.b32.xlu0 %v228, 7
    %v242 = vpop.permute.xlu0 %241
    %245 = vrot.lane.b32.xlu0 %v221, 11
    %v246 = vpop.permute.xlu0 %245
    %v248 = vsel %vm145, %v138, %v238
    %vm249 = vcmask 72704
    %v250 = vsel %vm249, %v248, %v242
    %vm251 = vcmask 89088
    %v252 = vsel %vm251, %v250, %v246
    %v253 = vld [vmem:[%s3] sm:$0xff]
    %v254 = vld [vmem:[%s3 + $0x8] sm:$0xff]
    %v255 = vld [vmem:[%s3 + $0x10] sm:$0xff]
    %256 = vset.pattern.permute.xlu0 0
    %257 = vperm.xlu0 %256, %v253
    %v258 = vpop.permute.xlu0 %257
    %259 = vset.pattern.permute.xlu0 0
    %260 = vperm.xlu0 %259, %v254
    %v261 = vpop.permute.xlu0 %260
    %262 = vset.pattern.permute.xlu0 0
    %263 = vperm.xlu0 %262, %v255
    %v264 = vpop.permute.xlu0 %263
    %vm265 = vcmp.eq.s32.totalorder %v94, %v258
    %vm266 = vcmp.eq.s32.totalorder %v94, %v261
    %vm267 = vcmp.eq.s32.totalorder %v94, %v264
    %v268 = vsel %vm265, 1, 0
    %v269 = vsel %vm266, 1, 0
    %v270 = vsel %vm267, 1, 0
    %v271 = vcvt.s32.f32 %v268
    %v272 = vcvt.s32.f32 %v269
    %v273 = vcvt.s32.f32 %v270
    %v274 = vld [vmem:[%s4] sm:$0xff]
    %v275 = vld [vmem:[%s4 + $0x8] sm:$0xff]
    %v276 = vld [vmem:[%s4 + $0x10] sm:$0xff]
    %277 = vset.pattern.permute.xlu0 0
    %278 = vperm.xlu0 %277, %v274
    %v279 = vpop.permute.xlu0 %278
    %280 = vset.pattern.permute.xlu0 0
    %281 = vperm.xlu0 %280, %v275
    %v282 = vpop.permute.xlu0 %281
    %283 = vset.pattern.permute.xlu0 0
    %284 = vperm.xlu0 %283, %v276
    %v285 = vpop.permute.xlu0 %284
    %vm286 = vcmp.eq.s32.totalorder %v94, %v279
    %vm287 = vcmp.eq.s32.totalorder %v94, %v282
    %vm288 = vcmp.eq.s32.totalorder %v94, %v285
    %v289 = vsel %vm286, 1, 0
    %v290 = vsel %vm287, 1, 0
    %v291 = vsel %vm288, 1, 0
    %v292 = vcvt.s32.f32 %v289
    %v293 = vcvt.s32.f32 %v290
    %v294 = vcvt.s32.f32 %v291
    %v296 = vsel %vm175, %v271, 0
    %v299 = vsel %vm175, %v272, 0
    %v302 = vsel %vm175, %v273, 0
    %304 = vmatpush.msra.mxu0 0.0
    %305 = vmatpush.msra.mxu0 0.0
    %306 = vmatpush.msra.mxu0 0.0
    %307 = vmatpush.msra.mxu0 0.0
    %308 = vmatpush.msra.mxu0 0.0
    %309 = vmatpush.msra.mxu0 0.0
    %310 = vmatpush.msra.mxu0 0.0
    %311 = vmatpush.msra.mxu0 0.0
    %312 = vmatpush.msra.mxu0 0.0
    %313 = vmatpush.msra.mxu0 0.0
    %314 = vmatpush.msra.mxu0 0.0
    %315 = vmatpush.msra.mxu0 0.0
    %316 = vmatpush.msra.mxu0 0.0
    %317 = vmatpush.msra.mxu0 0.0
    %318 = vmatpush.msra.mxu0 0.0
    %319 = vmatpush.msra.mxu0 %v252
    %320 = vmatmul.f32.gmra.mxu0 %v296
    %v321 = vpop.f32.mrf.mxu0
    %v322 = vadd.f32 0.0, %v321
    %323 = vmatmul.f32.gmra.mxu0 %v299
    %v324 = vpop.f32.mrf.mxu0
    %v325 = vadd.f32 0.0, %v324
    %326 = vmatmul.f32.gmra.mxu0 %v302
    %v327 = vpop.f32.mrf.mxu0
    %v328 = vadd.f32 0.0, %v327
    %329 = vdwg.mxu0
    %v331 = vsel %vm175, %v292, 0
    %v334 = vsel %vm175, %v293, 0
    %v337 = vsel %vm175, %v294, 0
    %339 = vmatpush.msra.mxu0 0.0
    %340 = vmatpush.msra.mxu0 0.0
    %341 = vmatpush.msra.mxu0 0.0
    %342 = vmatpush.msra.mxu0 0.0
    %343 = vmatpush.msra.mxu0 0.0
    %344 = vmatpush.msra.mxu0 0.0
    %345 = vmatpush.msra.mxu0 0.0
    %346 = vmatpush.msra.mxu0 0.0
    %347 = vmatpush.msra.mxu0 0.0
    %348 = vmatpush.msra.mxu0 0.0
    %349 = vmatpush.msra.mxu0 0.0
    %350 = vmatpush.msra.mxu0 0.0
    %351 = vmatpush.msra.mxu0 0.0
    %352 = vmatpush.msra.mxu0 0.0
    %353 = vmatpush.msra.mxu0 0.0
    %354 = vmatpush.msra.mxu0 %v252
    %355 = vmatmul.f32.gmra.mxu0 %v331
    %v356 = vpop.f32.mrf.mxu0
    %v357 = vadd.f32 0.0, %v356
    %358 = vmatmul.f32.gmra.mxu0 %v334
    %v359 = vpop.f32.mrf.mxu0
    %v360 = vadd.f32 0.0, %v359
    %361 = vmatmul.f32.gmra.mxu0 %v337
    %v362 = vpop.f32.mrf.mxu0
    %v363 = vadd.f32 0.0, %v362
    %364 = vdwg.mxu0
    %v365 = vsub.f32 %v357, %v322
    %v366 = vsub.f32 %v360, %v325
    %v367 = vsub.f32 %v363, %v328
    %371 = vrot.lane.b32.xlu0 %v322, 126
    %v372 = vpop.permute.xlu0 %371
    %373 = vrot.lane.b32.xlu0 %v325, 126
    %v374 = vpop.permute.xlu0 %373
    %375 = vrot.lane.b32.xlu0 %v328, 126
    %v376 = vpop.permute.xlu0 %375
    %v380 = vrcp.pop %v372
    %v381 = vmul.f32 %v372, %v380
    %v382 = vsub.f32 1.0, %v381
    %v383 = vmul.f32 %v380, %v382
    %v384 = vadd.f32 %v380, %v383
    %vm385 = vweird.f32 %v372
    %vm386 = vweird.f32 %v380
    %vm387 = vmor %vm385, %vm386
    %v388 = vsel %vm387, %v380, %v384
    %v389 = vand.u32 2147483647, %v372
    %vm390 = vcmp.eq.f32.partialorder %v389, 8.507059e+37
    %v391 = vand.u32 %v372, 2147483648
    %v392 = vor.u32 1.1754944e-38, %v391
    %v393 = vsel %vm390, %v392, %v388
    %v394 = vmul.f32 %v365, %v393
    %v395 = vrcp.pop %v374
    %v396 = vmul.f32 %v374, %v395
    %v397 = vsub.f32 1.0, %v396
    %v398 = vmul.f32 %v395, %v397
    %v399 = vadd.f32 %v395, %v398
    %vm400 = vweird.f32 %v374
    %vm401 = vweird.f32 %v395
    %vm402 = vmor %vm400, %vm401
    %v403 = vsel %vm402, %v395, %v399
    %v404 = vand.u32 2147483647, %v374
    %vm405 = vcmp.eq.f32.partialorder %v404, 8.507059e+37
    %v406 = vand.u32 %v374, 2147483648
    %v407 = vor.u32 1.1754944e-38, %v406
    %v408 = vsel %vm405, %v407, %v403
    %v409 = vmul.f32 %v366, %v408
    %v410 = vrcp.pop %v376
    %v411 = vmul.f32 %v376, %v410
    %v412 = vsub.f32 1.0, %v411
    %v413 = vmul.f32 %v410, %v412
    %v414 = vadd.f32 %v410, %v413
    %vm415 = vweird.f32 %v376
    %vm416 = vweird.f32 %v410
    %vm417 = vmor %vm415, %vm416
    %v418 = vsel %vm417, %v410, %v414
    %v419 = vand.u32 2147483647, %v376
    %vm420 = vcmp.eq.f32.partialorder %v419, 8.507059e+37
    %v421 = vand.u32 %v376, 2147483648
    %v422 = vor.u32 1.1754944e-38, %v421
    %v423 = vsel %vm420, %v422, %v418
    %v424 = vmul.f32 %v367, %v423
    %v425 = vrcp.pop %v322
    %v426 = vmul.f32 %v322, %v425
    %v427 = vsub.f32 1.0, %v426
    %v428 = vmul.f32 %v425, %v427
    %v429 = vadd.f32 %v425, %v428
    %vm430 = vweird.f32 %v322
    %vm431 = vweird.f32 %v425
    %vm432 = vmor %vm430, %vm431
    %v433 = vsel %vm432, %v425, %v429
    %v434 = vand.u32 2147483647, %v322
    %vm435 = vcmp.eq.f32.partialorder %v434, 8.507059e+37
    %v436 = vand.u32 %v322, 2147483648
    %v437 = vor.u32 1.1754944e-38, %v436
    %v438 = vsel %vm435, %v437, %v433
    %v439 = vmul.f32 %v357, %v438
    %v440 = vrcp.pop %v325
    %v441 = vmul.f32 %v325, %v440
    %v442 = vsub.f32 1.0, %v441
    %v443 = vmul.f32 %v440, %v442
    %v444 = vadd.f32 %v440, %v443
    %vm445 = vweird.f32 %v325
    %vm446 = vweird.f32 %v440
    %vm447 = vmor %vm445, %vm446
    %v448 = vsel %vm447, %v440, %v444
    %v449 = vand.u32 2147483647, %v325
    %vm450 = vcmp.eq.f32.partialorder %v449, 8.507059e+37
    %v451 = vand.u32 %v325, 2147483648
    %v452 = vor.u32 1.1754944e-38, %v451
    %v453 = vsel %vm450, %v452, %v448
    %v454 = vmul.f32 %v360, %v453
    %v455 = vrcp.pop %v328
    %v456 = vmul.f32 %v328, %v455
    %v457 = vsub.f32 1.0, %v456
    %v458 = vmul.f32 %v455, %v457
    %v459 = vadd.f32 %v455, %v458
    %vm460 = vweird.f32 %v328
    %vm461 = vweird.f32 %v455
    %vm462 = vmor %vm460, %vm461
    %v463 = vsel %vm462, %v455, %v459
    %v464 = vand.u32 2147483647, %v328
    %vm465 = vcmp.eq.f32.partialorder %v464, 8.507059e+37
    %v466 = vand.u32 %v328, 2147483648
    %v467 = vor.u32 1.1754944e-38, %v466
    %v468 = vsel %vm465, %v467, %v463
    %v469 = vmul.f32 %v363, %v468
    %v470 = vlog2.pop %v439
    %v471 = vmul.f32 %v470, 0.6931472
    %v472 = vlog2.pop %v454
    %v473 = vmul.f32 %v472, 0.6931472
    %v474 = vlog2.pop %v469
    %v475 = vmul.f32 %v474, 0.6931472
    %479 = vrot.lane.b32.xlu0 %v357, 4
    %v480 = vpop.permute.xlu0 %479
    %481 = vrot.lane.b32.xlu0 %v360, 4
    %v482 = vpop.permute.xlu0 %481
    %483 = vrot.lane.b32.xlu0 %v363, 4
    %v484 = vpop.permute.xlu0 %483
    %491 = vrot.lane.b32.xlu0 %v394, 4
    %v492 = vpop.permute.xlu0 %491
    %493 = vrot.lane.b32.xlu0 %v409, 4
    %v494 = vpop.permute.xlu0 %493
    %495 = vrot.lane.b32.xlu0 %v424, 4
    %v496 = vpop.permute.xlu0 %495
    %503 = vrot.lane.b32.xlu0 %v471, 4
    %v504 = vpop.permute.xlu0 %503
    %505 = vrot.lane.b32.xlu0 %v473, 4
    %v506 = vpop.permute.xlu0 %505
    %507 = vrot.lane.b32.xlu0 %v475, 4
    %v508 = vpop.permute.xlu0 %507
    %512 = vrot.lane.b32.xlu0 %v322, 4
    %v513 = vpop.permute.xlu0 %512
    %514 = vrot.lane.b32.xlu0 %v325, 4
    %v515 = vpop.permute.xlu0 %514
    %516 = vrot.lane.b32.xlu0 %v328, 4
    %v517 = vpop.permute.xlu0 %516
    %521 = vrot.lane.b32.xlu0 %v357, 36
    %v522 = vpop.permute.xlu0 %521
    %523 = vrot.lane.b32.xlu0 %v360, 36
    %v524 = vpop.permute.xlu0 %523
    %525 = vrot.lane.b32.xlu0 %v363, 36
    %v526 = vpop.permute.xlu0 %525
    %v530 = vsel %vm145, %v322, %v480
    %v531 = vsel %vm145, %v325, %v482
    %v532 = vsel %vm145, %v328, %v484
    %v533 = vsel %vm251, %v530, %v492
    %v534 = vsel %vm251, %v531, %v494
    %v535 = vsel %vm251, %v532, %v496
    %vm536 = vcmask 105472
    %v537 = vsel %vm536, %v533, %v504
    %v538 = vsel %vm536, %v534, %v506
    %v539 = vsel %vm536, %v535, %v508
    %vm540 = vcmask 121856
    %v541 = vsel %vm540, %v537, %v513
    %v542 = vsel %vm540, %v538, %v515
    %v543 = vsel %vm540, %v539, %v517
    %vm544 = vcmask 384000
    %v545 = vsel %vm544, %v541, %v522
    %v546 = vsel %vm544, %v542, %v524
    %v547 = vsel %vm544, %v543, %v526
    %v548 = vld [vmem:[%s10] sm:$0xf]
    %v549 = vld [vmem:[%s10 + $0x4] sm:$0xf]
    %v550 = vld [vmem:[%s10 + $0x8] sm:$0xf]
    %v551 = vld [vmem:[%s10 + $0xc] sm:$0xf]
    %v552 = vld [vmem:[%s10 + $0x10] sm:$0xf]
    %v553 = vld [vmem:[%s10 + $0x14] sm:$0xf]
    %v554 = vld [vmem:[%s10 + $0x18] sm:$0xf]
    %v555 = vld [vmem:[%s10 + $0x1c] sm:$0xf]
    %v556 = vld [vmem:[%s10 + $0x20] sm:$0xf]
    %v557 = vld [vmem:[%s10 + $0x24] sm:$0xf]
    %v558 = vpack.c.bf16 %v546, %v545
    %v559 = vpack.c.bf16 %v547, %v547
    %v560 = vld [vmem:[%s11] sm:$0x1]
    %v562 = vperm.slane %v560, 0
    %v574 = vunpack.c.l.b16 %v548
    %v575 = vunpack.c.l.b16 %v549
    %v576 = vunpack.c.l.b16 %v550
    %v577 = vunpack.c.l.b16 %v551
    %v578 = vunpack.c.l.b16 %v552
    %v579 = vunpack.c.l.b16 %v553
    %v580 = vunpack.c.l.b16 %v554
    %v581 = vunpack.c.l.b16 %v555
    %v582 = vunpack.c.l.b16 %v556
    %v583 = vunpack.c.l.b16 %v557
    %v584 = vpack.c.b16 %v575, %v574
    %v585 = vpack.c.b16 %v577, %v576
    %v586 = vpack.c.b16 %v579, %v578
    %v587 = vpack.c.b16 %v581, %v580
    %v588 = vpack.c.b16 %v583, %v582
    %vm593 = vcmask 646144
    %v595 = vsel %vm593, %v558, 0
    %v598 = vsel %vm593, %v559, 0
    %vm600 = vcmask 1046528
    %vm601 = vcmask 1047552
    %v602 = vsel %vm600, 4294967295, 65535
    %v603 = vsel %vm601, %v602, 0
    %v605 = vand.u32 %v588, %v603
    %607 = vmatpush.bf16.msra.mxu0 0
    %608 = vmatpush.bf16.msra.mxu0 0
    %609 = vmatpush.bf16.msra.mxu0 0
    %610 = vmatpush.bf16.msra.mxu0 %v605
    %611 = vmatpush.bf16.msra.mxu0 %v587
    %612 = vmatpush.bf16.msra.mxu0 %v586
    %613 = vmatpush.bf16.msra.mxu0 %v585
    %614 = vmatpush.bf16.msra.mxu0 %v584
    %615 = vmatmul.bf16.gmra.mxu0 %v595
    %v616 = vpop.f32.mrf.mxu0
    %v617 = vadd.f32 %v562, %v616
    %v618 = vpop.f32.mrf.mxu0
    %v619 = vadd.f32 %v562, %v618
    %620 = vmatmul.bf16.gmra.mxu0 %v598
    %v621 = vpop.f32.mrf.mxu0
    %v622 = vadd.f32 %v562, %v621
    %v623 = vpop.f32.mrf.mxu0
    %624 = vdwg.mxu0
    %v625 = vld [vmem:[%s12] sm:$0x1]
    %vm626 = vcmp.gt.f32.partialorder %v625, 0.0
    %v627 = vmax.f32 %v617, 0.0
    %v628 = vmax.f32 %v619, 0.0
    %v629 = vmax.f32 %v622, 0.0
    %v630 = vsel %vm626, 1, 0
    %v631 = vperm.slane %v630, 0
    %vm632 = vcmp.eq.s32.totalorder %v631, 1
    %v633 = vsel %vm632, %v627, %v617
    %v634 = vsel %vm632, %v628, %v619
    %v635 = vsel %vm632, %v629, %v622
    %v636 = vld [vmem:[#allocation2] sm:$0xff]
    %v637 = vld [vmem:[#allocation2 + $0x8] sm:$0xf]
    %v638 = vld [vmem:[#allocation2 + $0xc] sm:$0xff]
    %v639 = vld [vmem:[#allocation2 + $0x14] sm:$0xf]
    %v640 = vld [vmem:[#allocation2 + $0x18] sm:$0xff]
    %v641 = vld [vmem:[#allocation2 + $0x20] sm:$0xf]
    %v642 = vld [vmem:[#allocation2 + $0x24] sm:$0xff]
    %v643 = vld [vmem:[#allocation2 + $0x2c] sm:$0xf]
    %v644 = vld [vmem:[#allocation2 + $0x30] sm:$0xff]
    %v645 = vld [vmem:[#allocation2 + $0x38] sm:$0xf]
    %v646 = vld [vmem:[#allocation2 + $0x3c] sm:$0xff]
    %v647 = vld [vmem:[#allocation2 + $0x44] sm:$0xf]
    %v648 = vld [vmem:[#allocation2 + $0x48] sm:$0xff]
    %v649 = vld [vmem:[#allocation2 + $0x50] sm:$0xf]
    %v650 = vld [vmem:[#allocation2 + $0x54] sm:$0xff]
    %v651 = vld [vmem:[#allocation2 + $0x5c] sm:$0xf]
    %v652 = vld [vmem:[#allocation2 + $0x60] sm:$0xff]
    %v653 = vld [vmem:[#allocation2 + $0x68] sm:$0xf]
    %v654 = vld [vmem:[#allocation2 + $0x6c] sm:$0xff]
    %v655 = vld [vmem:[#allocation2 + $0x74] sm:$0xf]
    %v656 = vld [vmem:[#allocation2 + $0x78] sm:$0xff]
    %v657 = vld [vmem:[#allocation2 + $0x80] sm:$0xf]
    %v658 = vld [vmem:[#allocation2 + $0x84] sm:$0xff]
    %v659 = vld [vmem:[#allocation2 + $0x8c] sm:$0xf]
    %v660 = vld [vmem:[#allocation2 + $0x90] sm:$0xff]
    %v661 = vld [vmem:[#allocation2 + $0x98] sm:$0xf]
    %v662 = vld [vmem:[#allocation2 + $0x9c] sm:$0xff]
    %v663 = vld [vmem:[#allocation2 + $0xa4] sm:$0xf]
    %v664 = vld [vmem:[#allocation2 + $0xa8] sm:$0xff]
    %v665 = vld [vmem:[#allocation2 + $0xb0] sm:$0xf]
    %v666 = vld [vmem:[#allocation2 + $0xb4] sm:$0xff]
    %v667 = vld [vmem:[#allocation2 + $0xbc] sm:$0xf]
    %v668 = vpack.c.bf16 %v634, %v633
    %v669 = vpack.c.bf16 %v635, %v635
    %v670 = vld [vmem:[%s14] sm:$0x7]
    %v672 = vperm.slane %v670, 0
    %v673 = vperm.slane %v670, 1
    %v674 = vperm.slane %v670, 2
    %v710 = vunpack.c.l.b16 %v636
    %v711 = vunpack.c.h.b16 %v636
    %v712 = vunpack.c.l.b16 %v637
    %v713 = vunpack.c.l.b16 %v638
    %v714 = vunpack.c.h.b16 %v638
    %v715 = vunpack.c.l.b16 %v639
    %v716 = vunpack.c.l.b16 %v640
    %v717 = vunpack.c.h.b16 %v640
    %v718 = vunpack.c.l.b16 %v641
    %v719 = vunpack.c.l.b16 %v642
    %v720 = vunpack.c.h.b16 %v642
    %v721 = vunpack.c.l.b16 %v643
    %v722 = vunpack.c.l.b16 %v644
    %v723 = vunpack.c.h.b16 %v644
    %v724 = vunpack.c.l.b16 %v645
    %v725 = vunpack.c.l.b16 %v646
    %v726 = vunpack.c.h.b16 %v646
    %v727 = vunpack.c.l.b16 %v647
    %v728 = vunpack.c.l.b16 %v648
    %v729 = vunpack.c.h.b16 %v648
    %v730 = vunpack.c.l.b16 %v649
    %v731 = vunpack.c.l.b16 %v650
    %v732 = vunpack.c.h.b16 %v650
    %v733 = vunpack.c.l.b16 %v651
    %v734 = vunpack.c.l.b16 %v652
    %v735 = vunpack.c.h.b16 %v652
    %v736 = vunpack.c.l.b16 %v653
    %v737 = vunpack.c.l.b16 %v654
    %v738 = vunpack.c.h.b16 %v654
    %v739 = vunpack.c.l.b16 %v655
    %v740 = vunpack.c.l.b16 %v656
    %v741 = vunpack.c.h.b16 %v656
    %v742 = vunpack.c.l.b16 %v657
    %v743 = vunpack.c.l.b16 %v658
    %v744 = vunpack.c.h.b16 %v658
    %v745 = vunpack.c.l.b16 %v659
    %v746 = vunpack.c.l.b16 %v660
    %v747 = vunpack.c.h.b16 %v660
    %v748 = vunpack.c.l.b16 %v661
    %v749 = vunpack.c.l.b16 %v662
    %v750 = vunpack.c.h.b16 %v662
    %v751 = vunpack.c.l.b16 %v663
    %v752 = vunpack.c.l.b16 %v664
    %v753 = vunpack.c.h.b16 %v664
    %v754 = vunpack.c.l.b16 %v665
    %v755 = vunpack.c.l.b16 %v666
    %v756 = vunpack.c.h.b16 %v666
    %v757 = vunpack.c.l.b16 %v667
    %v758 = vpack.c.b16 %v713, %v710
    %v759 = vpack.c.b16 %v714, %v711
    %v760 = vpack.c.b16 %v715, %v712
    %v761 = vpack.c.b16 %v719, %v716
    %v762 = vpack.c.b16 %v720, %v717
    %v763 = vpack.c.b16 %v721, %v718
    %v764 = vpack.c.b16 %v725, %v722
    %v765 = vpack.c.b16 %v726, %v723
    %v766 = vpack.c.b16 %v727, %v724
    %v767 = vpack.c.b16 %v731, %v728
    %v768 = vpack.c.b16 %v732, %v729
    %v769 = vpack.c.b16 %v733, %v730
    %v770 = vpack.c.b16 %v737, %v734
    %v771 = vpack.c.b16 %v738, %v735
    %v772 = vpack.c.b16 %v739, %v736
    %v773 = vpack.c.b16 %v743, %v740
    %v774 = vpack.c.b16 %v744, %v741
    %v775 = vpack.c.b16 %v745, %v742
    %v776 = vpack.c.b16 %v749, %v746
    %v777 = vpack.c.b16 %v750, %v747
    %v778 = vpack.c.b16 %v751, %v748
    %v779 = vpack.c.b16 %v755, %v752
    %v780 = vpack.c.b16 %v756, %v753
    %v781 = vpack.c.b16 %v757, %v754
    %806 = vmatpush.bf16.msra.mxu0 %v779
    %807 = vmatpush.bf16.msra.mxu0 %v776
    %808 = vmatpush.bf16.msra.mxu0 %v773
    %809 = vmatpush.bf16.msra.mxu0 %v770
    %810 = vmatpush.bf16.msra.mxu0 %v767
    %811 = vmatpush.bf16.msra.mxu0 %v764
    %812 = vmatpush.bf16.msra.mxu0 %v761
    %813 = vmatpush.bf16.msra.mxu0 %v758
    %814 = vmatmul.bf16.gmra.mxu0 %v668
    %v815 = vpop.f32.mrf.mxu0
    %v816 = vadd.f32 %v672, %v815
    %v817 = vpop.f32.mrf.mxu0
    %v818 = vadd.f32 %v672, %v817
    %819 = vmatmul.bf16.gmra.mxu0 %v669
    %v820 = vpop.f32.mrf.mxu0
    %v821 = vadd.f32 %v672, %v820
    %v822 = vpop.f32.mrf.mxu0
    %823 = vdwg.mxu0
    %824 = vmatpush.bf16.msra.mxu0 %v780
    %825 = vmatpush.bf16.msra.mxu0 %v777
    %826 = vmatpush.bf16.msra.mxu0 %v774
    %827 = vmatpush.bf16.msra.mxu0 %v771
    %828 = vmatpush.bf16.msra.mxu0 %v768
    %829 = vmatpush.bf16.msra.mxu0 %v765
    %830 = vmatpush.bf16.msra.mxu0 %v762
    %831 = vmatpush.bf16.msra.mxu0 %v759
    %832 = vmatmul.bf16.gmra.mxu0 %v668
    %v833 = vpop.f32.mrf.mxu0
    %v834 = vadd.f32 %v673, %v833
    %v835 = vpop.f32.mrf.mxu0
    %v836 = vadd.f32 %v673, %v835
    %837 = vmatmul.bf16.gmra.mxu0 %v669
    %v838 = vpop.f32.mrf.mxu0
    %v839 = vadd.f32 %v673, %v838
    %v840 = vpop.f32.mrf.mxu0
    %841 = vdwg.mxu0
    %842 = vmatpush.bf16.msra.mxu0 %v781
    %843 = vmatpush.bf16.msra.mxu0 %v778
    %844 = vmatpush.bf16.msra.mxu0 %v775
    %845 = vmatpush.bf16.msra.mxu0 %v772
    %846 = vmatpush.bf16.msra.mxu0 %v769
    %847 = vmatpush.bf16.msra.mxu0 %v766
    %848 = vmatpush.bf16.msra.mxu0 %v763
    %849 = vmatpush.bf16.msra.mxu0 %v760
    %850 = vmatmul.bf16.gmra.mxu0 %v668
    %v851 = vpop.f32.mrf.mxu0
    %v852 = vadd.f32 %v674, %v851
    %v853 = vpop.f32.mrf.mxu0
    %v854 = vadd.f32 %v674, %v853
    %855 = vmatmul.bf16.gmra.mxu0 %v669
    %v856 = vpop.f32.mrf.mxu0
    %v857 = vadd.f32 %v674, %v856
    %v858 = vpop.f32.mrf.mxu0
    %859 = vdwg.mxu0
    %v860 = vld [vmem:[%s15] sm:$0x7]
    %vm861 = vcmp.gt.f32.partialorder %v860, 0.0
    %v862 = vmax.f32 %v816, 0.0
    %v863 = vmax.f32 %v834, 0.0
    %v864 = vmax.f32 %v852, 0.0
    %v865 = vmax.f32 %v818, 0.0
    %v866 = vmax.f32 %v836, 0.0
    %v867 = vmax.f32 %v854, 0.0
    %v868 = vmax.f32 %v821, 0.0
    %v869 = vmax.f32 %v839, 0.0
    %v870 = vmax.f32 %v857, 0.0
    %v871 = vsel %vm861, 1, 0
    %v872 = vperm.slane %v871, 0
    %v873 = vperm.slane %v871, 1
    %v874 = vperm.slane %v871, 2
    %vm875 = vcmp.eq.s32.totalorder %v872, 1
    %vm876 = vcmp.eq.s32.totalorder %v873, 1
    %vm877 = vcmp.eq.s32.totalorder %v874, 1
    %v878 = vsel %vm875, %v862, %v816
    %v879 = vsel %vm876, %v863, %v834
    %v880 = vsel %vm877, %v864, %v852
    %v881 = vsel %vm875, %v865, %v818
    %v882 = vsel %vm876, %v866, %v836
    %v883 = vsel %vm877, %v867, %v854
    %v884 = vsel %vm875, %v868, %v821
    %v885 = vsel %vm876, %v869, %v839
    %v886 = vsel %vm877, %v870, %v857
    %vm887 = vcmp.gt.f32.partialorder %v880, 0.0
    %vm888 = vcmp.gt.f32.partialorder %v883, 0.0
    %vm889 = vcmp.gt.f32.partialorder %v886, 0.0
    %v890 = vsel %vm887, 1, 0
    %v891 = vsel %vm888, 1, 0
    %v892 = vsel %vm889, 1, 0
    %v893 = vcvt.s32.f32 %v890
    %v894 = vcvt.s32.f32 %v891
    %v895 = vcvt.s32.f32 %v892
    %v896 = vld [vmem:[%s16] sm:$0xf]
    %v897 = vld [vmem:[%s16 + $0x4] sm:$0xf]
    %v898 = vld [vmem:[%s16 + $0x8] sm:$0xf]
    %v899 = vld [vmem:[%s16 + $0xc] sm:$0xf]
    %v900 = vld [vmem:[%s16 + $0x10] sm:$0xf]
    %v901 = vld [vmem:[%s16 + $0x14] sm:$0xf]
    %v902 = vld [vmem:[%s16 + $0x18] sm:$0xf]
    %v903 = vld [vmem:[%s16 + $0x1c] sm:$0xf]
    %v904 = vld [vmem:[%s16 + $0x20] sm:$0xf]
    %v905 = vld [vmem:[%s16 + $0x24] sm:$0xf]
    %v906 = vld [vmem:[%s16 + $0x28] sm:$0xf]
    %v907 = vld [vmem:[%s16 + $0x2c] sm:$0xf]
    %v908 = vld [vmem:[%s16 + $0x30] sm:$0xf]
    %v909 = vld [vmem:[%s16 + $0x34] sm:$0xf]
    %v910 = vld [vmem:[%s16 + $0x38] sm:$0xf]
    %v911 = vld [vmem:[%s16 + $0x3c] sm:$0xf]
    %v912 = vpack.c.bf16 %v881, %v878
    %v913 = vpack.c.bf16 %v884, %v884
    %v914 = vld [vmem:[%s17] sm:$0x1]
    %v916 = vperm.slane %v914, 0
    %v934 = vunpack.c.l.b16 %v896
    %v935 = vunpack.c.l.b16 %v897
    %v936 = vunpack.c.l.b16 %v898
    %v937 = vunpack.c.l.b16 %v899
    %v938 = vunpack.c.l.b16 %v900
    %v939 = vunpack.c.l.b16 %v901
    %v940 = vunpack.c.l.b16 %v902
    %v941 = vunpack.c.l.b16 %v903
    %v942 = vunpack.c.l.b16 %v904
    %v943 = vunpack.c.l.b16 %v905
    %v944 = vunpack.c.l.b16 %v906
    %v945 = vunpack.c.l.b16 %v907
    %v946 = vunpack.c.l.b16 %v908
    %v947 = vunpack.c.l.b16 %v909
    %v948 = vunpack.c.l.b16 %v910
    %v949 = vunpack.c.l.b16 %v911
    %v950 = vpack.c.b16 %v935, %v934
    %v951 = vpack.c.b16 %v937, %v936
    %v952 = vpack.c.b16 %v939, %v938
    %v953 = vpack.c.b16 %v941, %v940
    %v954 = vpack.c.b16 %v943, %v942
    %v955 = vpack.c.b16 %v945, %v944
    %v956 = vpack.c.b16 %v947, %v946
    %v957 = vpack.c.b16 %v949, %v948
    %966 = vmatpush.bf16.msra.mxu0 %v957
    %967 = vmatpush.bf16.msra.mxu0 %v956
    %968 = vmatpush.bf16.msra.mxu0 %v955
    %969 = vmatpush.bf16.msra.mxu0 %v954
    %970 = vmatpush.bf16.msra.mxu0 %v953
    %971 = vmatpush.bf16.msra.mxu0 %v952
    %972 = vmatpush.bf16.msra.mxu0 %v951
    %973 = vmatpush.bf16.msra.mxu0 %v950
    %974 = vmatmul.bf16.gmra.mxu0 %v912
    %v975 = vpop.f32.mrf.mxu0
    %v976 = vadd.f32 %v916, %v975
    %v977 = vpop.f32.mrf.mxu0
    %v978 = vadd.f32 %v916, %v977
    %979 = vmatmul.bf16.gmra.mxu0 %v913
    %v980 = vpop.f32.mrf.mxu0
    %v981 = vadd.f32 %v916, %v980
    %v982 = vpop.f32.mrf.mxu0
    %983 = vdwg.mxu0
    %v984 = vsel %vm175, %v976, -inf
    %985 = vmax.xlane.f32.xlu0 %v984
    %v986 = vpop.xlane.xlu0 %985
    %v987 = vsel %vm175, %v978, -inf
    %988 = vmax.xlane.f32.xlu0 %v987
    %v989 = vpop.xlane.xlu0 %988
    %v990 = vsel %vm175, %v981, -inf
    %991 = vmax.xlane.f32.xlu0 %v990
    %v992 = vpop.xlane.xlu0 %991
    %v993 = vsub.f32 %v976, %v986
    %v994 = vsub.f32 %v978, %v989
    %v995 = vsub.f32 %v981, %v992
    %v996 = vmul.f32 %v993, 1.442695
    %v997 = vpow.pop %v996
    %v998 = vmul.f32 %v994, 1.442695
    %v999 = vpow.pop %v998
    %v1000 = vmul.f32 %v995, 1.442695
    %v1001 = vpow.pop %v1000
    %v1002 = vsel %vm175, %v997, 0.0
    %1003 = vadd.xlane.f32.xlu0 %v1002
    %v1004 = vpop.xlane.xlu0 %1003
    %v1005 = vsel %vm175, %v999, 0.0
    %1006 = vadd.xlane.f32.xlu0 %v1005
    %v1007 = vpop.xlane.xlu0 %1006
    %v1008 = vsel %vm175, %v1001, 0.0
    %1009 = vadd.xlane.f32.xlu0 %v1008
    %v1010 = vpop.xlane.xlu0 %1009
    %v1011 = vrcp.pop %v1004
    %v1012 = vrcp.pop %v1007
    %v1013 = vrcp.pop %v1010
    %v1014 = vmul.f32 %v997, %v1011
    %v1015 = vmul.f32 %v999, %v1012
    %v1016 = vmul.f32 %v1001, %v1013
    %v1017 = vld [vmem:[%s18] sm:$0xf]
    %v1018 = vld [vmem:[%s18 + $0x4] sm:$0xf]
    %v1019 = vld [vmem:[%s18 + $0x8] sm:$0xf]
    %v1020 = vld [vmem:[%s18 + $0xc] sm:$0xf]
    %v1021 = vld [vmem:[%s18 + $0x10] sm:$0xf]
    %v1022 = vld [vmem:[%s18 + $0x14] sm:$0xf]
    %v1023 = vld [vmem:[%s18 + $0x18] sm:$0xf]
    %v1024 = vld [vmem:[%s18 + $0x1c] sm:$0xf]
    %v1025 = vpack.c.bf16 %v166, %v166
    %v1026 = vld [vmem:[%s19] sm:$0x1]
    %v1028 = vperm.slane %v1026, 0
    %v1038 = vunpack.c.l.b16 %v1017
    %v1039 = vunpack.c.l.b16 %v1018
    %v1040 = vunpack.c.l.b16 %v1019
    %v1041 = vunpack.c.l.b16 %v1020
    %v1042 = vunpack.c.l.b16 %v1021
    %v1043 = vunpack.c.l.b16 %v1022
    %v1044 = vunpack.c.l.b16 %v1023
    %v1045 = vunpack.c.l.b16 %v1024
    %v1046 = vpack.c.b16 %v1039, %v1038
    %v1047 = vpack.c.b16 %v1041, %v1040
    %v1048 = vpack.c.b16 %v1043, %v1042
    %v1049 = vpack.c.b16 %v1045, %v1044
    %vm1054 = vcmask 523264
    %v1056 = vsel %vm1054, %v1025, 0
    %1058 = vmatpush.bf16.msra.mxu0 0
    %1059 = vmatpush.bf16.msra.mxu0 0
    %1060 = vmatpush.bf16.msra.mxu0 0
    %1061 = vmatpush.bf16.msra.mxu0 0
    %1062 = vmatpush.bf16.msra.mxu0 %v1049
    %1063 = vmatpush.bf16.msra.mxu0 %v1048
    %1064 = vmatpush.bf16.msra.mxu0 %v1047
    %1065 = vmatpush.bf16.msra.mxu0 %v1046
    %1066 = vmatmul.bf16.gmra.mxu0 %v1056
    %v1067 = vpop.f32.mrf.mxu0
    %v1068 = vadd.f32 %v1028, %v1067
    %v1069 = vpop.f32.mrf.mxu0
    %1070 = vdwg.mxu0
    %v1071 = vlaneseq
    %v1072 = vshrl.u32 %v1071, 7
    %v1073 = vadd.s32 %v1072, 8
    %v1074 = vadd.s32 %v1072, 16
    %vm1075 = vcmp.eq.s32.totalorder %v1072, %v94
    %vm1076 = vcmp.eq.s32.totalorder %v1073, %v94
    %vm1077 = vcmp.eq.s32.totalorder %v1074, %v94
    %v1078 = vsel %vm1075, 1, 0
    %v1079 = vsel %vm1076, 1, 0
    %v1080 = vsel %vm1077, 1, 0
    %v1081 = vcvt.s32.f32 %v1078
    %v1082 = vcvt.s32.f32 %v1079
    %v1083 = vcvt.s32.f32 %v1080
    %1085 = vset.pattern.permute.xlu0 64
    %1086 = vperm.xlu0 %1085, %v893
    %v1087 = vpop.permute.xlu0 %1086
    %1090 = vset.pattern.permute.xlu0 64
    %1091 = vperm.xlu0 %1090, %v894
    %v1092 = vpop.permute.xlu0 %1091
    %1095 = vset.pattern.permute.xlu0 64
    %1096 = vperm.xlu0 %1095, %v895
    %v1097 = vpop.permute.xlu0 %1096
    %v1099 = vmul.f32 %v1081, %v1087
    %v1100 = vmul.f32 %v1082, %v1092
    %v1101 = vmul.f32 %v1083, %v1097
    %vm1102 = vcmask 195584
    %v1103 = vsel %vm1102, %v1099, 0.0
    %v1104 = vsel %vm1102, %v1100, 0.0
    %v1105 = vadd.f32 %v1103, %v1104
    %v1106 = vsel %vm1102, %v1101, 0.0
    %v1107 = vadd.f32 %v1105, %v1106
    %v1108 = vrot.slane %v1107, 4
    %v1109 = vadd.f32 %v1107, %v1108
    %v1110 = vrot.slane %v1109, 2
    %v1111 = vadd.f32 %v1109, %v1110
    %v1112 = vrot.slane %v1111, 1
    %v1113 = vadd.f32 %v1111, %v1112
    %v1114 = vld [vmem:[%s5] sm:$0x1]
    %v1115 = vperm.slane %v1114, 0
    %vm1116 = vcmp.eq.s32.totalorder %v1072, %v1115
    %v1117 = vsel %vm1116, 1, 0
    %v1118 = vcvt.s32.f32 %v1117
    %v1119 = vld [vmem:[%s6] sm:$0x1]
    %v1120 = vperm.slane %v1119, 0
    %vm1121 = vcmp.eq.s32.totalorder %v1072, %v1120
    %v1122 = vsel %vm1121, 1, 0
    %v1123 = vcvt.s32.f32 %v1122
    %v1124 = vmul.f32 %v1118, %v1113
    %v1125 = vmul.f32 %v1123, %v1113
    %v1127 = vrot.slane %v1068, 1
    %v1128 = vrot.slane %v1068, 2
    %v1129 = vrot.slane %v1068, 3
    %v1130 = vrot.slane %v1068, 4
    %v1131 = vrot.slane %v1068, 5
    %v1132 = vrot.slane %v1068, 6
    %v1133 = vrot.slane %v1068, 7
    %v1134 = vperm.slane %v1068, 0
    %v1135 = vperm.slane %v1127, 0
    %v1136 = vperm.slane %v1128, 0
    %v1137 = vperm.slane %v1129, 0
    %v1138 = vperm.slane %v1130, 0
    %v1139 = vperm.slane %v1131, 0
    %v1140 = vperm.slane %v1132, 0
    %v1141 = vperm.slane %v1133, 0
    %1153 = vrot.lane.b32.xlu0 %v880, 64
    %v1154 = vpop.permute.xlu0 %1153
    %1155 = vrot.lane.b32.xlu0 %v883, 64
    %v1156 = vpop.permute.xlu0 %1155
    %1157 = vrot.lane.b32.xlu0 %v886, 64
    %v1158 = vpop.permute.xlu0 %1157
    %v1162 = vadd.f32 %v1134, %v1154
    %v1163 = vadd.f32 %v1134, %v1156
    %v1164 = vadd.f32 %v1134, %v1158
    %v1165 = vadd.f32 %v1135, %v1154
    %v1166 = vadd.f32 %v1135, %v1156
    %v1167 = vadd.f32 %v1135, %v1158
    %v1168 = vadd.f32 %v1136, %v1154
    %v1169 = vadd.f32 %v1136, %v1156
    %v1170 = vadd.f32 %v1136, %v1158
    %v1171 = vadd.f32 %v1137, %v1154
    %v1172 = vadd.f32 %v1137, %v1156
    %v1173 = vadd.f32 %v1137, %v1158
    %v1174 = vadd.f32 %v1138, %v1154
    %v1175 = vadd.f32 %v1138, %v1156
    %v1176 = vadd.f32 %v1138, %v1158
    %v1177 = vadd.f32 %v1139, %v1154
    %v1178 = vadd.f32 %v1139, %v1156
    %v1179 = vadd.f32 %v1139, %v1158
    %v1180 = vadd.f32 %v1140, %v1154
    %v1181 = vadd.f32 %v1140, %v1156
    %v1182 = vadd.f32 %v1140, %v1158
    %v1183 = vadd.f32 %v1141, %v1154
    %v1184 = vadd.f32 %v1141, %v1156
    %v1185 = vadd.f32 %v1141, %v1158
    %v1186 = vmax.f32 %v1162, 0.0
    %v1187 = vmax.f32 %v1163, 0.0
    %v1188 = vmax.f32 %v1164, 0.0
    %v1189 = vmax.f32 %v1165, 0.0
    %v1190 = vmax.f32 %v1166, 0.0
    %v1191 = vmax.f32 %v1167, 0.0
    %v1192 = vmax.f32 %v1168, 0.0
    %v1193 = vmax.f32 %v1169, 0.0
    %v1194 = vmax.f32 %v1170, 0.0
    %v1195 = vmax.f32 %v1171, 0.0
    %v1196 = vmax.f32 %v1172, 0.0
    %v1197 = vmax.f32 %v1173, 0.0
    %v1198 = vmax.f32 %v1174, 0.0
    %v1199 = vmax.f32 %v1175, 0.0
    %v1200 = vmax.f32 %v1176, 0.0
    %v1201 = vmax.f32 %v1177, 0.0
    %v1202 = vmax.f32 %v1178, 0.0
    %v1203 = vmax.f32 %v1179, 0.0
    %v1204 = vmax.f32 %v1180, 0.0
    %v1205 = vmax.f32 %v1181, 0.0
    %v1206 = vmax.f32 %v1182, 0.0
    %v1207 = vmax.f32 %v1183, 0.0
    %v1208 = vmax.f32 %v1184, 0.0
    %v1209 = vmax.f32 %v1185, 0.0
    %v1210 = vld [vmem:[%s20] sm:$0x1]
    %v1212 = vperm.slane %v1210, 0
    %1213 = vrot.lane.b32.xlu0 %v1212, 64
    %v1214 = vpop.permute.xlu0 %1213
    %v1216 = vmul.f32 %v1186, %v1214
    %v1217 = vmul.f32 %v1187, %v1214
    %v1218 = vmul.f32 %v1188, %v1214
    %v1219 = vmul.f32 %v1189, %v1214
    %v1220 = vmul.f32 %v1190, %v1214
    %v1221 = vmul.f32 %v1191, %v1214
    %v1222 = vmul.f32 %v1192, %v1214
    %v1223 = vmul.f32 %v1193, %v1214
    %v1224 = vmul.f32 %v1194, %v1214
    %v1225 = vmul.f32 %v1195, %v1214
    %v1226 = vmul.f32 %v1196, %v1214
    %v1227 = vmul.f32 %v1197, %v1214
    %v1228 = vmul.f32 %v1198, %v1214
    %v1229 = vmul.f32 %v1199, %v1214
    %v1230 = vmul.f32 %v1200, %v1214
    %v1231 = vmul.f32 %v1201, %v1214
    %v1232 = vmul.f32 %v1202, %v1214
    %v1233 = vmul.f32 %v1203, %v1214
    %v1234 = vmul.f32 %v1204, %v1214
    %v1235 = vmul.f32 %v1205, %v1214
    %v1236 = vmul.f32 %v1206, %v1214
    %v1237 = vmul.f32 %v1207, %v1214
    %v1238 = vmul.f32 %v1208, %v1214
    %v1239 = vmul.f32 %v1209, %v1214
    %1264 = vrot.lane.b32.xlu0 %v1216, 64
    %v1265 = vpop.permute.xlu0 %1264
    %1266 = vrot.lane.b32.xlu0 %v1217, 64
    %v1267 = vpop.permute.xlu0 %1266
    %1268 = vrot.lane.b32.xlu0 %v1218, 64
    %v1269 = vpop.permute.xlu0 %1268
    %1270 = vrot.lane.b32.xlu0 %v1219, 64
    %v1271 = vpop.permute.xlu0 %1270
    %1272 = vrot.lane.b32.xlu0 %v1220, 64
    %v1273 = vpop.permute.xlu0 %1272
    %1274 = vrot.lane.b32.xlu0 %v1221, 64
    %v1275 = vpop.permute.xlu0 %1274
    %1276 = vrot.lane.b32.xlu0 %v1222, 64
    %v1277 = vpop.permute.xlu0 %1276
    %1278 = vrot.lane.b32.xlu0 %v1223, 64
    %v1279 = vpop.permute.xlu0 %1278
    %1280 = vrot.lane.b32.xlu0 %v1224, 64
    %v1281 = vpop.permute.xlu0 %1280
    %1282 = vrot.lane.b32.xlu0 %v1225, 64
    %v1283 = vpop.permute.xlu0 %1282
    %1284 = vrot.lane.b32.xlu0 %v1226, 64
    %v1285 = vpop.permute.xlu0 %1284
    %1286 = vrot.lane.b32.xlu0 %v1227, 64
    %v1287 = vpop.permute.xlu0 %1286
    %1288 = vrot.lane.b32.xlu0 %v1228, 64
    %v1289 = vpop.permute.xlu0 %1288
    %1290 = vrot.lane.b32.xlu0 %v1229, 64
    %v1291 = vpop.permute.xlu0 %1290
    %1292 = vrot.lane.b32.xlu0 %v1230, 64
    %v1293 = vpop.permute.xlu0 %1292
    %1294 = vrot.lane.b32.xlu0 %v1231, 64
    %v1295 = vpop.permute.xlu0 %1294
    %1296 = vrot.lane.b32.xlu0 %v1232, 64
    %v1297 = vpop.permute.xlu0 %1296
    %1298 = vrot.lane.b32.xlu0 %v1233, 64
    %v1299 = vpop.permute.xlu0 %1298
    %1300 = vrot.lane.b32.xlu0 %v1234, 64
    %v1301 = vpop.permute.xlu0 %1300
    %1302 = vrot.lane.b32.xlu0 %v1235, 64
    %v1303 = vpop.permute.xlu0 %1302
    %1304 = vrot.lane.b32.xlu0 %v1236, 64
    %v1305 = vpop.permute.xlu0 %1304
    %1306 = vrot.lane.b32.xlu0 %v1237, 64
    %v1307 = vpop.permute.xlu0 %1306
    %1308 = vrot.lane.b32.xlu0 %v1238, 64
    %v1309 = vpop.permute.xlu0 %1308
    %1310 = vrot.lane.b32.xlu0 %v1239, 64
    %v1311 = vpop.permute.xlu0 %1310
    %v1336 = vsel %vm1054, %v1265, 0.0
    %1337 = vadd.xlane.f32.xlu0 %v1336
    %v1338 = vpop.xlane.xlu0 %1337
    %v1339 = vsel %vm1054, %v1267, 0.0
    %1340 = vadd.xlane.f32.xlu0 %v1339
    %v1341 = vpop.xlane.xlu0 %1340
    %v1342 = vsel %vm1054, %v1269, 0.0
    %1343 = vadd.xlane.f32.xlu0 %v1342
    %v1344 = vpop.xlane.xlu0 %1343
    %v1345 = vsel %vm1054, %v1271, 0.0
    %1346 = vadd.xlane.f32.xlu0 %v1345
    %v1347 = vpop.xlane.xlu0 %1346
    %v1348 = vsel %vm1054, %v1273, 0.0
    %1349 = vadd.xlane.f32.xlu0 %v1348
    %v1350 = vpop.xlane.xlu0 %1349
    %v1351 = vsel %vm1054, %v1275, 0.0
    %1352 = vadd.xlane.f32.xlu0 %v1351
    %v1353 = vpop.xlane.xlu0 %1352
    %v1354 = vsel %vm1054, %v1277, 0.0
    %1355 = vadd.xlane.f32.xlu0 %v1354
    %v1356 = vpop.xlane.xlu0 %1355
    %v1357 = vsel %vm1054, %v1279, 0.0
    %1358 = vadd.xlane.f32.xlu0 %v1357
    %v1359 = vpop.xlane.xlu0 %1358
    %v1360 = vsel %vm1054, %v1281, 0.0
    %1361 = vadd.xlane.f32.xlu0 %v1360
    %v1362 = vpop.xlane.xlu0 %1361
    %v1363 = vsel %vm1054, %v1283, 0.0
    %1364 = vadd.xlane.f32.xlu0 %v1363
    %v1365 = vpop.xlane.xlu0 %1364
    %v1366 = vsel %vm1054, %v1285, 0.0
    %1367 = vadd.xlane.f32.xlu0 %v1366
    %v1368 = vpop.xlane.xlu0 %1367
    %v1369 = vsel %vm1054, %v1287, 0.0
    %1370 = vadd.xlane.f32.xlu0 %v1369
    %v1371 = vpop.xlane.xlu0 %1370
    %v1372 = vsel %vm1054, %v1289, 0.0
    %1373 = vadd.xlane.f32.xlu0 %v1372
    %v1374 = vpop.xlane.xlu0 %1373
    %v1375 = vsel %vm1054, %v1291, 0.0
    %1376 = vadd.xlane.f32.xlu0 %v1375
    %v1377 = vpop.xlane.xlu0 %1376
    %v1378 = vsel %vm1054, %v1293, 0.0
    %1379 = vadd.xlane.f32.xlu0 %v1378
    %v1380 = vpop.xlane.xlu0 %1379
    %v1381 = vsel %vm1054, %v1295, 0.0
    %1382 = vadd.xlane.f32.xlu0 %v1381
    %v1383 = vpop.xlane.xlu0 %1382
    %v1384 = vsel %vm1054, %v1297, 0.0
    %1385 = vadd.xlane.f32.xlu0 %v1384
    %v1386 = vpop.xlane.xlu0 %1385
    %v1387 = vsel %vm1054, %v1299, 0.0
    %1388 = vadd.xlane.f32.xlu0 %v1387
    %v1389 = vpop.xlane.xlu0 %1388
    %v1390 = vsel %vm1054, %v1301, 0.0
    %1391 = vadd.xlane.f32.xlu0 %v1390
    %v1392 = vpop.xlane.xlu0 %1391
    %v1393 = vsel %vm1054, %v1303, 0.0
    %1394 = vadd.xlane.f32.xlu0 %v1393
    %v1395 = vpop.xlane.xlu0 %1394
    %v1396 = vsel %vm1054, %v1305, 0.0
    %1397 = vadd.xlane.f32.xlu0 %v1396
    %v1398 = vpop.xlane.xlu0 %1397
    %v1399 = vsel %vm1054, %v1307, 0.0
    %1400 = vadd.xlane.f32.xlu0 %v1399
    %v1401 = vpop.xlane.xlu0 %1400
    %v1402 = vsel %vm1054, %v1309, 0.0
    %1403 = vadd.xlane.f32.xlu0 %v1402
    %v1404 = vpop.xlane.xlu0 %1403
    %v1405 = vsel %vm1054, %v1311, 0.0
    %1406 = vadd.xlane.f32.xlu0 %v1405
    %v1407 = vpop.xlane.xlu0 %1406
    %vm1408 = vcmp.gt.f32.partialorder %v1124, 0.0
    %v1433 = vperm.slane %v1338, %v94
    %v1434 = vadd.s32 %v94, 4294967288
    %v1435 = vperm.slane %v1341, %v1434
    %vm1436 = vcmask 130112
    %v1437 = vsel %vm1436, %v1435, %v1433
    %v1438 = vadd.s32 %v94, 4294967280
    %v1439 = vperm.slane %v1344, %v1438
    %vm1440 = vcmask 195712
    %v1441 = vsel %vm1440, %v1439, %v1437
    %v1442 = vperm.slane %v1347, %v94
    %v1443 = vperm.slane %v1350, %v1434
    %v1444 = vsel %vm1436, %v1443, %v1442
    %v1445 = vperm.slane %v1353, %v1438
    %v1446 = vsel %vm1440, %v1445, %v1444
    %v1447 = vperm.slane %v1356, %v94
    %v1448 = vperm.slane %v1359, %v1434
    %v1449 = vsel %vm1436, %v1448, %v1447
    %v1450 = vperm.slane %v1362, %v1438
    %v1451 = vsel %vm1440, %v1450, %v1449
    %v1452 = vperm.slane %v1365, %v94
    %v1453 = vperm.slane %v1368, %v1434
    %v1454 = vsel %vm1436, %v1453, %v1452
    %v1455 = vperm.slane %v1371, %v1438
    %v1456 = vsel %vm1440, %v1455, %v1454
    %v1457 = vperm.slane %v1374, %v94
    %v1458 = vperm.slane %v1377, %v1434
    %v1459 = vsel %vm1436, %v1458, %v1457
    %v1460 = vperm.slane %v1380, %v1438
    %v1461 = vsel %vm1440, %v1460, %v1459
    %v1462 = vperm.slane %v1383, %v94
    %v1463 = vperm.slane %v1386, %v1434
    %v1464 = vsel %vm1436, %v1463, %v1462
    %v1465 = vperm.slane %v1389, %v1438
    %v1466 = vsel %vm1440, %v1465, %v1464
    %v1467 = vperm.slane %v1392, %v94
    %v1468 = vperm.slane %v1395, %v1434
    %v1469 = vsel %vm1436, %v1468, %v1467
    %v1470 = vperm.slane %v1398, %v1438
    %v1471 = vsel %vm1440, %v1470, %v1469
    %v1472 = vperm.slane %v1401, %v94
    %v1473 = vperm.slane %v1404, %v1434
    %v1474 = vsel %vm1436, %v1473, %v1472
    %v1475 = vperm.slane %v1407, %v1438
    %v1476 = vsel %vm1440, %v1475, %v1474
    %vm1477 = vcmask 1041409
    %v1478 = vsel %vm1477, %v1446, %v1441
    %vm1479 = vcmask 1042434
    %v1480 = vsel %vm1479, %v1451, %v1478
    %vm1481 = vcmask 1043459
    %v1482 = vsel %vm1481, %v1456, %v1480
    %vm1483 = vcmask 1044484
    %v1484 = vsel %vm1483, %v1461, %v1482
    %vm1485 = vcmask 1045509
    %v1486 = vsel %vm1485, %v1466, %v1484
    %vm1487 = vcmask 1046534
    %v1488 = vsel %vm1487, %v1471, %v1486
    %vm1489 = vcmask 1047559
    %v1490 = vsel %vm1489, %v1476, %v1488
    %v1492 = vsel %vm1408, %v1490, -1e+30
    %v1493 = vsel %vm1102, %v1492, -inf
    %1494 = vmax.xlane.f32.xlu0 %v1493
    %v1495 = vpop.xlane.xlu0 %1494
    %v1496 = vsub.f32 %v1492, %v1495
    %v1497 = vmul.f32 %v1496, 1.442695
    %v1498 = vpow.pop %v1497
    %v1499 = vmul.f32 %v1498, %v1124
    %v1500 = vsel %vm1102, %v1499, 0.0
    %1501 = vadd.xlane.f32.xlu0 %v1500
    %v1502 = vpop.xlane.xlu0 %1501
    %v1503 = vmax.f32 %v1502, 1e-20
    %v1504 = vrcp.pop %v1503
    %v1505 = vmul.f32 %v1499, %v1504
    %vm1506 = vcmp.gt.f32.partialorder %v1125, 0.0
    %v1507 = vsel %vm1506, %v1490, -1e+30
    %v1508 = vsel %vm1102, %v1507, -inf
    %1509 = vmax.xlane.f32.xlu0 %v1508
    %v1510 = vpop.xlane.xlu0 %1509
    %v1511 = vsub.f32 %v1507, %v1510
    %v1512 = vmul.f32 %v1511, 1.442695
    %v1513 = vpow.pop %v1512
    %v1514 = vmul.f32 %v1513, %v1125
    %v1515 = vsel %vm1102, %v1514, 0.0
    %1516 = vadd.xlane.f32.xlu0 %v1515
    %v1517 = vpop.xlane.xlu0 %1516
    %v1518 = vmax.f32 %v1517, 1e-20
    %v1519 = vrcp.pop %v1518
    %v1520 = vmul.f32 %v1514, %v1519
    %v1521 = vpack.c.bf16 %v1505, %v1505
    %v1522 = vpack.c.bf16 %v882, %v879
    %v1523 = vpack.c.bf16 %v885, %v885
    %v1524 = vpack.c.bf16 %v1520, %v1520
    %1527 = vrot.lane.b32.xlu0 %v1522, 64
    %v1528 = vpop.permute.xlu0 %1527
    %1529 = vrot.lane.b32.xlu0 %v1523, 64
    %v1530 = vpop.permute.xlu0 %1529
    %v1533 = vsel %vm1102, %v1524, 0
    %v1536 = vsel %vm150, %v1530, 0
    %1538 = vmatpush.bf16.msra.mxu0 0
    %1539 = vmatpush.bf16.msra.mxu0 0
    %1540 = vmatpush.bf16.msra.mxu0 0
    %1541 = vmatpush.bf16.msra.mxu0 0
    %1542 = vmatpush.bf16.msra.mxu0 0
    %1543 = vmatpush.bf16.msra.mxu0 0
    %1544 = vmatpush.bf16.msra.mxu0 %v1536
    %1545 = vmatpush.bf16.msra.mxu0 %v1528
    %1546 = vmatmul.bf16.gmra.mxu0 %v1533
    %v1547 = vpop.f32.mrf.mxu0
    %v1548 = vadd.f32 0.0, %v1547
    %v1549 = vpop.f32.mrf.mxu0
    %1550 = vdwg.mxu0
    %v1552 = vsel %vm1102, %v1521, 0
    %v1555 = vsel %vm150, %v1523, 0
    %1557 = vmatpush.bf16.msra.mxu0 0
    %1558 = vmatpush.bf16.msra.mxu0 0
    %1559 = vmatpush.bf16.msra.mxu0 0
    %1560 = vmatpush.bf16.msra.mxu0 0
    %1561 = vmatpush.bf16.msra.mxu0 0
    %1562 = vmatpush.bf16.msra.mxu0 0
    %1563 = vmatpush.bf16.msra.mxu0 %v1555
    %1564 = vmatpush.bf16.msra.mxu0 %v1522
    %1565 = vmatmul.bf16.gmra.mxu0 %v1552
    %v1566 = vpop.f32.mrf.mxu0
    %v1567 = vadd.f32 %v1548, %v1566
    %v1568 = vpop.f32.mrf.mxu0
    %1569 = vdwg.mxu0
    %v1570 = vadd.f32 %v1068, %v1567
    %v1571 = vmax.f32 %v1570, 0.0
    %v1572 = vsel %vm1102, %v1124, 0.0
    %1573 = vadd.xlane.f32.xlu0 %v1572
    %v1574 = vpop.xlane.xlu0 %1573
    %vm1575 = vcmp.gt.f32.partialorder %v1574, 0.0
    %v1576 = vsel %vm1575, 1, 0
    %vm1577 = vcmp.eq.s32.totalorder %v1576, 1
    %v1578 = vsel %vm1577, %v1571, %v166
    %v1579 = vld [vmem:[%s21] sm:$0xf]
    %v1580 = vld [vmem:[%s21 + $0x4] sm:$0xf]
    %v1581 = vld [vmem:[%s21 + $0x8] sm:$0xf]
    %v1582 = vld [vmem:[%s21 + $0xc] sm:$0xf]
    %v1583 = vld [vmem:[%s21 + $0x10] sm:$0xf]
    %v1584 = vld [vmem:[%s21 + $0x14] sm:$0xf]
    %v1585 = vld [vmem:[%s21 + $0x18] sm:$0xf]
    %v1586 = vld [vmem:[%s21 + $0x1c] sm:$0xf]
    %v1587 = vpack.c.bf16 %v1578, %v1578
    %v1588 = vld [vmem:[%s22] sm:$0x1]
    %v1590 = vperm.slane %v1588, 0
    %v1600 = vunpack.c.l.b16 %v1579
    %v1601 = vunpack.c.l.b16 %v1580
    %v1602 = vunpack.c.l.b16 %v1581
    %v1603 = vunpack.c.l.b16 %v1582
    %v1604 = vunpack.c.l.b16 %v1583
    %v1605 = vunpack.c.l.b16 %v1584
    %v1606 = vunpack.c.l.b16 %v1585
    %v1607 = vunpack.c.l.b16 %v1586
    %v1608 = vpack.c.b16 %v1601, %v1600
    %v1609 = vpack.c.b16 %v1603, %v1602
    %v1610 = vpack.c.b16 %v1605, %v1604
    %v1611 = vpack.c.b16 %v1607, %v1606
    %v1617 = vsel %vm1054, %v1587, 0
    %1619 = vmatpush.bf16.msra.mxu0 0
    %1620 = vmatpush.bf16.msra.mxu0 0
    %1621 = vmatpush.bf16.msra.mxu0 0
    %1622 = vmatpush.bf16.msra.mxu0 0
    %1623 = vmatpush.bf16.msra.mxu0 %v1611
    %1624 = vmatpush.bf16.msra.mxu0 %v1610
    %1625 = vmatpush.bf16.msra.mxu0 %v1609
    %1626 = vmatpush.bf16.msra.mxu0 %v1608
    %1627 = vmatmul.bf16.gmra.mxu0 %v1617
    %v1628 = vpop.f32.mrf.mxu0
    %v1629 = vadd.f32 %v1590, %v1628
    %v1630 = vpop.f32.mrf.mxu0
    %1631 = vdwg.mxu0
    %v1632 = vsel %vm169, %v1629, -1e+30
    %v1633 = vsel %vm175, %v1632, -inf
    %1634 = vmax.xlane.f32.xlu0 %v1633
    %v1635 = vpop.xlane.xlu0 %1634
    %vm1636 = vcmp.eq.f32.partialorder %v1632, %v1635
    %v1637 = vsel %vm1636, %v94, 8
    %v1638 = vsel %vm175, %v1637, 2147483647
    %v1639 = vand.u32 %v1638, 65535
    %v1640 = vshra.s32 %v1638, 16
    %v1641 = vcvt.s32.f32 %v1639
    %v1642 = vcvt.s32.f32 %v1640
    %1643 = vmin.xlane.f32.xlu0 %v1642
    %v1644 = vpop.xlane.xlu0 %1643
    %vm1645 = vcmp.eq.f32.partialorder %v1642, %v1644
    %v1646 = vsel %vm1645, %v1641, inf
    %1647 = vmin.xlane.f32.xlu0 %v1646
    %v1648 = vpop.xlane.xlu0 %1647
    %v1649 = vcvt.f32.s32 %v1648
    %v1650 = vcvt.f32.s32 %v1644
    %v1651 = vshll.u32 %v1650, 16
    %v1652 = vadd.s32 %v1651, %v1649
    %v1653 = vsub.f32 %v1632, %v1635
    %v1654 = vmul.f32 %v1653, 1.442695
    %v1655 = vpow.pop %v1654
    %v1656 = vsel %vm169, %v1655, 0.0
    %v1657 = vsel %vm175, %v1656, 0.0
    %1658 = vadd.xlane.f32.xlu0 %v1657
    %v1659 = vpop.xlane.xlu0 %1658
    %v1660 = vrcp.pop %v1659
    %v1661 = vmul.f32 %v1656, %v1660
    %v1662 = vsel %vm175, %v1661, -inf
    %1663 = vmax.xlane.f32.xlu0 %v1662
    %v1664 = vpop.xlane.xlu0 %1663
    %1665 = vst [vmem:[%s23] sm:$0xff] 0.0
    %vm1666 = vcmask 7168
    %1667 = vst.msk [vmem:[%s23] sm:$0xff] %vm1666, %v1664
    %v1668 = vcvt.s32.f32 %v1652
    %vm1669 = vcmask 15368
    %1670 = vst.msk [vmem:[%s23] sm:$0xff] %vm1669, %v1668
    %1671 = vst [vmem:[%s24] sm:$0xff] 0.0
    %1672 = vst [vmem:[%s24 + $0x8] sm:$0xff] 0.0
    %1673 = vst [vmem:[%s24 + $0x10] sm:$0xff] 0.0
    %1674 = vst.msk [vmem:[%s24] sm:$0xff] %vm175, %v1014
    %1675 = vst.msk [vmem:[%s24 + $0x8] sm:$0xff] %vm175, %v1015
    %1676 = vst.msk [vmem:[%s24 + $0x10] sm:$0xff] %vm175, %v1016
    %1677 = vrot.lane.b32.xlu0 %v893, 72
    %v1678 = vpop.permute.xlu0 %1677
    %1679 = vrot.lane.b32.xlu0 %v894, 72
    %v1680 = vpop.permute.xlu0 %1679
    %1681 = vrot.lane.b32.xlu0 %v895, 72
    %v1682 = vpop.permute.xlu0 %1681
    %vm1686 = vcmask 72768
    %1687 = vst.msk [vmem:[%s24] sm:$0xff] %vm1686, %v1678
    %1688 = vst.msk [vmem:[%s24 + $0x8] sm:$0xff] %vm1686, %v1680
    %1689 = vst.msk [vmem:[%s24 + $0x10] sm:$0xff] %vm1686, %v1682
    // Predicated region
    $region98: #{forward_core.1} parent=1 // pred_check
      _
    $region99: #{forward_core.1} parent=1 // pred_check_branch
      %1691 = sbr.rel (0) target = $region101
    $region100: #{forward_core.1} parent=1 // pred_region
      _
    $region101: #{forward_core.1} parent=1 // pred_fallthru
      _
    // Predicated region
    $region102: #{forward_core.1} parent=1 // pred_check
      _
    $region103: #{forward_core.1} parent=1 // pred_check_branch
      %1693 = sbr.rel (0) target = $region105
    $region104: #{forward_core.1} parent=1 // pred_region
      _
    $region105: #{forward_core.1} parent=1 // pred_fallthru
      _
    // Predicated region
    $region106: #{forward_core.1} parent=1 // pred_check
      _
    $region107: #{forward_core.1} parent=1 // pred_check_branch
      %1695 = sbr.rel (0) target = $region109
    $region108: #{forward_core.1} parent=1 // pred_region
      _
    $region109: #{forward_core.1} parent=1 // pred_fallthru
      _
    // Predicated region
    $region110: #{forward_core.1} parent=1 // pred_check
      _
    $region111: #{forward_core.1} parent=1 // pred_check_branch
      %1697 = sbr.rel (0) target = $region113
    $region112: #{forward_core.1} parent=1 // pred_region
      _
    $region113: #{forward_core.1} parent=1 // pred_fallthru
      _
    %1698 = vsyncpa [#allocation3], 1

</llo_original>
